<compile_context>
chip_gen: v6e
topology: v6e:2x2x1
jax: 0.10.0
libtpu: 0.0.40
codegen_flags: <defaults>
</compile_context>

<pallas_src>
import functools
import math

import jax
import jax.numpy as jnp
from jax.experimental import pallas as pl
from jax.experimental.pallas import tpu as pltpu

_BN_EPS = 1e-5


# ---------------------------------------------------------------------------
# Fused kernel: Conv+ReLU+BN -> Conv+ReLU+BN, all in VMEM.
# ---------------------------------------------------------------------------
def _stacked_conv_kernel(
    xp_ref,                      # (H+2p, N*W*Cin)       H-padded, batch-in-lanes input
    w1_ref,                      # (KH, N*W*Cin, N*Wo1*C1)   block-diag row-Toeplitz
    b1_ref, g1_ref, bt1_ref,     # (1, N*Wo1*C1)         bias / BN gamma / BN beta
    sel1_ref, sel1t_ref,         # (N*Wo1*C1, C1), (C1, N*Wo1*C1)  channel pooling
    w2_ref,                      # (KH, N*Wo1*C1, N*Wo2*C2)
    b2_ref, g2_ref, bt2_ref,     # (1, N*Wo2*C2)
    sel2_ref, sel2t_ref,         # (N*Wo2*C2, C2), (C2, N*Wo2*C2)
    o_ref,                       # (Ho2, N*Wo2*C2)       lane-dense output
    xp2_sc,                      # (Ho1+2p, N*Wo1*C1)    VMEM scratch (H-padded mid)
    *, dims,
):
    pad, KH, Ho1, Ho2, cnt1, cnt2 = dims

    def conv(x_sc, w_ref, Ho):
        # One matmul per kh tap for the WHOLE batch (block-diag weight keeps
        # images independent); kh=1,2 starts are the only sublane-offset reads.
        acc = jnp.dot(x_sc[0:Ho, :], w_ref[0],
                      preferred_element_type=jnp.float32)
        for kh in range(1, KH):
            acc = acc + jnp.dot(x_sc[kh:kh + Ho, :], w_ref[kh],
                                preferred_element_type=jnp.float32)
        return acc

    def bn_scale_shift(y, g_ref, bt_ref, sel_ref, selt_ref, count):
        # Single-pass BatchNorm (training mode: biased variance over N*Ho*Wo).
        # NOTE: E[x^2]-mean^2 is clamped at 0; at much larger scales a
        # two-pass / shifted variance would be more robust numerically.
        inv_cnt = 1.0 / float(count)
        s1 = jnp.sum(y, axis=0, keepdims=True)          # (1, N*Wo*C)
        s2 = jnp.sum(y * y, axis=0, keepdims=True)
        stats = jnp.concatenate([s1, s2], axis=0)       # (2, N*Wo*C): 1 MXU push
        pooled = jnp.dot(stats, sel_ref[...],
                         preferred_element_type=jnp.float32) * inv_cnt  # (2, C)
        mean_c = pooled[0:1, :]
        var_c = jnp.maximum(pooled[1:2, :] - mean_c * mean_c, 0.0)
        istd_c = jax.lax.rsqrt(var_c + _BN_EPS)         # (1, C)
        packed = jnp.concatenate([istd_c, mean_c], axis=0)   # (2, C): 1 push back
        bcast = jnp.dot(packed, selt_ref[...],
                        preferred_element_type=jnp.float32)  # (2, N*Wo*C)
        scale = bcast[0:1, :] * g_ref[...]
        shift = bt_ref[...] - bcast[1:2, :] * scale
        return scale, shift

    # ---- layer 1: conv -> bias+ReLU -> BN stats -------------------------------
    y1 = jnp.maximum(conv(xp_ref, w1_ref, Ho1) + b1_ref[...], 0.0)
    scale1, shift1 = bn_scale_shift(y1, g1_ref, bt1_ref, sel1_ref, sel1t_ref, cnt1)

    # Intermediate never leaves VMEM: the BN affine is fused with the store
    # that writes directly into the layer-2 padded scratch interior; only the
    # 2*pad halo rows are zero-filled (no full-buffer clear pass).
    if pad > 0:
        zrow = jnp.zeros((pad, xp2_sc.shape[1]), xp2_sc.dtype)
        xp2_sc[0:pad, :] = zrow
        xp2_sc[pad + Ho1:pad + Ho1 + pad, :] = zrow
    xp2_sc[pad:pad + Ho1, :] = y1 * scale1 + shift1

    # ---- layer 2: conv -> bias+ReLU -> BN -> output ---------------------------
    y2 = jnp.maximum(conv(xp2_sc, w2_ref, Ho2) + b2_ref[...], 0.0)
    scale2, shift2 = bn_scale_shift(y2, g2_ref, bt2_ref, sel2_ref, sel2t_ref, cnt2)
    o_ref[...] = (y2 * scale2 + shift2).astype(o_ref.dtype)


# ---------------------------------------------------------------------------
# Wrapper-side layout plumbing (weights/bias repacking, NCHW <-> lane layout).
# ---------------------------------------------------------------------------
def _blockdiag_row_conv_matrix(w, w_in, w_out, pad, n_batch):
    """(KH, KW, Cin, Cout) -> (KH, N*w_in*Cin, N*w_out*Cout) block-diag Toeplitz.

    Per-image Toeplitz block: T[kh, wi*Cin+ci, wo*Cout+co] = w[kh, wi-wo+pad,
    ci, co] when that tap lies in [0, KW), else 0 (W zero-padding folded in).
    The N image blocks sit on the diagonal so one matmul covers the batch
    without mixing images.
    """
    KH, KW, Cin, Cout = w.shape
    wi = jnp.arange(w_in)[:, None]
    wo = jnp.arange(w_out)[None, :]
    kw = wi - wo + pad
    valid = (kw >= 0) & (kw < KW)
    kw_idx = jnp.clip(kw, 0, KW - 1)
    t = w[:, kw_idx, :, :]                                  # (KH, Wi, Wo, Cin, Cout)
    t = jnp.where(valid[None, :, :, None, None], t, 0.0)
    t = t.transpose(0, 1, 3, 2, 4).reshape(KH, w_in * Cin, w_out * Cout)
    eye = jnp.eye(n_batch, dtype=t.dtype)
    big = jnp.einsum("nm,kab->knamb", eye, t)               # block-diagonal
    return big.reshape(KH, n_batch * w_in * Cin, n_batch * w_out * Cout)


def _channel_select(nwo, c_out):
    """(nwo*c_out, c_out) 0/1 matrix pooling lane q -> channel q % c_out."""
    q = jnp.arange(nwo * c_out)[:, None]
    c = jnp.arange(c_out)[None, :]
    return (q % c_out == c).astype(jnp.float32)


def _tile_channels(v, nwo):
    """(1, C) per-channel vector -> (1, nwo*C) lane layout (c fastest)."""
    return jnp.tile(v.reshape(1, -1), (1, nwo))


@functools.partial(jax.jit, static_argnames=("padding",))
def stacked_conv(x_nchw, params1, params2, *, padding):
    """StackedConv forward. x_nchw: (N, Cin, H, W) -> (N, Cout, Ho, Wo)."""
    N, Cin, H, W = x_nchw.shape
    w1, b1, g1, bt1 = params1
    w2, b2, g2, bt2 = params2
    KH, KW, _, C1 = w1.shape
    _, _, _, C2 = w2.shape

    Ho1, Wo1 = H + 2 * padding - KH + 1, W + 2 * padding - KW + 1
    Ho2, Wo2 = Ho1 + 2 * padding - KH + 1, Wo1 + 2 * padding - KW + 1

    # NCHW -> batch-in-lanes (H, N*W*Cin), H-padded in the wrapper (layout
    # plumbing only; removes one VMEM scratch + its staging stores).
    x2d = jnp.transpose(x_nchw, (2, 0, 3, 1)).reshape(H, N * W * Cin)
    xp = jnp.pad(x2d, ((padding, padding), (0, 0)))

    # Repack weights / per-channel vectors into the lane-dense layout.
    w1big = _blockdiag_row_conv_matrix(w1, W, Wo1, padding, N)
    w2big = _blockdiag_row_conv_matrix(w2, Wo1, Wo2, padding, N)
    b1f, g1f, bt1f = (_tile_channels(v, N * Wo1) for v in (b1, g1, bt1))
    b2f, g2f, bt2f = (_tile_channels(v, N * Wo2) for v in (b2, g2, bt2))
    sel1 = _channel_select(N * Wo1, C1)
    sel2 = _channel_select(N * Wo2, C2)

    dims = (padding, KH, Ho1, Ho2, N * Ho1 * Wo1, N * Ho2 * Wo2)
    kernel = functools.partial(_stacked_conv_kernel, dims=dims)

    vmem = pl.BlockSpec(memory_space=pltpu.MemorySpace.VMEM)
    out2d = pl.pallas_call(
        kernel,
        out_shape=jax.ShapeDtypeStruct((Ho2, N * Wo2 * C2), jnp.float32),
        in_specs=[vmem] * 13,
        out_specs=vmem,
        scratch_shapes=[
            pltpu.VMEM((Ho1 + 2 * padding, N * Wo1 * C1), jnp.float32),
        ],
    )(xp, w1big, b1f, g1f, bt1f, sel1, sel1.T,
      w2big, b2f, g2f, bt2f, sel2, sel2.T)

    # (Ho2, N*Wo2*C2) -> NCHW.
    out = out2d.reshape(Ho2, N, Wo2, C2)
    return jnp.transpose(out, (1, 3, 0, 2))


# ---------------------------------------------------------------------------
# Parameter init matching ConvRelu.__init__ semantics.
# ---------------------------------------------------------------------------
def init_conv_relu_params(key, in_channels, out_channels, kernel_size):
    k_w, k_b = jax.random.split(key)
    n = kernel_size * kernel_size * out_channels
    w = jax.random.normal(
        k_w, (kernel_size, kernel_size, in_channels, out_channels),
        dtype=jnp.float32) * math.sqrt(2.0 / n)
    fan_in = in_channels * kernel_size * kernel_size
    bound = 1.0 / math.sqrt(fan_in)
    b = jax.random.uniform(k_b, (1, out_channels), jnp.float32, -bound, bound)
    gamma = jnp.ones((1, out_channels), jnp.float32)
    beta = jnp.zeros((1, out_channels), jnp.float32)
    return w, b, gamma, beta


# ---------------------------------------------------------------------------
# Pure-JAX reference (for a correctness check in __main__).
# ---------------------------------------------------------------------------
def _reference_stacked_conv(x_nchw, params1, params2, padding):
    def block(x, params):
        w, b, g, bt = params
        y = jax.lax.conv_general_dilated(
            x, w, window_strides=(1, 1),
            padding=[(padding, padding), (padding, padding)],
            dimension_numbers=("NCHW", "HWIO", "NCHW"),
            precision=jax.lax.Precision.HIGHEST)
        y = y + b.reshape(1, -1, 1, 1)
        y = jnp.maximum(y, 0.0)
        mean = jnp.mean(y, axis=(0, 2, 3), keepdims=True)
        var = jnp.mean((y - mean) ** 2, axis=(0, 2, 3), keepdims=True)
        y = (y - mean) * jax.lax.rsqrt(var + _BN_EPS)
        return y * g.reshape(1, -1, 1, 1) + bt.reshape(1, -1, 1, 1)

    return block(block(x_nchw, params1), params2)


if __name__ == "__main__":
    batch, in_channels, out_channels = 2, 4, 8
    H = W = 16
    kernel_size, padding = 3, 1

    key = jax.random.PRNGKey(0)
    k_x, k_p1, k_p2 = jax.random.split(key, 3)

    x = jax.random.normal(k_x, (batch, in_channels, H, W), dtype=jnp.float32)
    params1 = init_conv_relu_params(k_p1, in_channels, out_channels, kernel_size)
    params2 = init_conv_relu_params(k_p2, out_channels, out_channels, kernel_size)

    out = stacked_conv(x, params1, params2, padding=padding)
    out = jax.block_until_ready(out)

    assert out.shape == (batch, out_channels, H, W), out.shape
    assert jnp.all(jnp.isfinite(out))

    ref = _reference_stacked_conv(x, params1, params2, padding)
    max_err = float(jnp.max(jnp.abs(out - ref)))
    assert max_err < 1e-3, f"max abs error vs reference: {max_err}"

    print("KERNEL_OK")
</pallas_src>

<mosaic_0001>
module attributes {stable_mosaic.version = 11 : i64} {
  func.func @_stacked_conv_kernel(%arg0: memref<18x128xf32, #tpu.memory_space<vmem>>, %arg1: memref<3x128x256xf32, #tpu.memory_space<vmem>>, %arg2: memref<1x256xf32, #tpu.memory_space<vmem>>, %arg3: memref<1x256xf32, #tpu.memory_space<vmem>>, %arg4: memref<1x256xf32, #tpu.memory_space<vmem>>, %arg5: memref<256x8xf32, #tpu.memory_space<vmem>>, %arg6: memref<8x256xf32, #tpu.memory_space<vmem>>, %arg7: memref<3x256x256xf32, #tpu.memory_space<vmem>>, %arg8: memref<1x256xf32, #tpu.memory_space<vmem>>, %arg9: memref<1x256xf32, #tpu.memory_space<vmem>>, %arg10: memref<1x256xf32, #tpu.memory_space<vmem>>, %arg11: memref<256x8xf32, #tpu.memory_space<vmem>>, %arg12: memref<8x256xf32, #tpu.memory_space<vmem>>, %arg13: memref<16x256xf32, #tpu.memory_space<vmem>>, %arg14: memref<18x256xf32, #tpu.memory_space<vmem>>) attributes {dimension_semantics = [], scalar_prefetch = 0 : i64, scratch_operands = 1 : i64, tpu.core_type = #tpu.core_type<tc>} {
    %c0 = arith.constant 0 : index
    %c0_0 = arith.constant 0 : index
    %0 = vector.load %arg0[%c0, %c0_0] : memref<18x128xf32, #tpu.memory_space<vmem>>, vector<16x128xf32>
    %c0_1 = arith.constant 0 : index
    %c0_2 = arith.constant 0 : index
    %c0_3 = arith.constant 0 : index
    %1 = vector.load %arg1[%c0_1, %c0_2, %c0_3] : memref<3x128x256xf32, #tpu.memory_space<vmem>>, vector<1x128x256xf32>
    %2 = vector.shape_cast %1 : vector<1x128x256xf32> to vector<128x256xf32>
    %cst = arith.constant dense<0.000000e+00> : vector<16x256xf32>
    %3 = tpu.matmul %0, %2, %cst {dimension_numbers = #tpu.dot_dimension_numbers<[1], [0], [0], [1], [0, 0, 1, 1], [], []>} : vector<16x128xf32>, vector<128x256xf32>, vector<16x256xf32> -> vector<16x256xf32>
    %c1 = arith.constant 1 : index
    %c0_4 = arith.constant 0 : index
    %4 = vector.load %arg0[%c1, %c0_4] : memref<18x128xf32, #tpu.memory_space<vmem>>, vector<16x128xf32>
    %c1_5 = arith.constant 1 : index
    %c0_6 = arith.constant 0 : index
    %c0_7 = arith.constant 0 : index
    %5 = vector.load %arg1[%c1_5, %c0_6, %c0_7] : memref<3x128x256xf32, #tpu.memory_space<vmem>>, vector<1x128x256xf32>
    %6 = vector.shape_cast %5 : vector<1x128x256xf32> to vector<128x256xf32>
    %cst_8 = arith.constant dense<0.000000e+00> : vector<16x256xf32>
    %7 = tpu.matmul %4, %6, %cst_8 {dimension_numbers = #tpu.dot_dimension_numbers<[1], [0], [0], [1], [0, 0, 1, 1], [], []>} : vector<16x128xf32>, vector<128x256xf32>, vector<16x256xf32> -> vector<16x256xf32>
    %8 = arith.addf %3, %7 : vector<16x256xf32>
    %c2 = arith.constant 2 : index
    %c0_9 = arith.constant 0 : index
    %9 = vector.load %arg0[%c2, %c0_9] : memref<18x128xf32, #tpu.memory_space<vmem>>, vector<16x128xf32>
    %c2_10 = arith.constant 2 : index
    %c0_11 = arith.constant 0 : index
    %c0_12 = arith.constant 0 : index
    %10 = vector.load %arg1[%c2_10, %c0_11, %c0_12] : memref<3x128x256xf32, #tpu.memory_space<vmem>>, vector<1x128x256xf32>
    %11 = vector.shape_cast %10 : vector<1x128x256xf32> to vector<128x256xf32>
    %cst_13 = arith.constant dense<0.000000e+00> : vector<16x256xf32>
    %12 = tpu.matmul %9, %11, %cst_13 {dimension_numbers = #tpu.dot_dimension_numbers<[1], [0], [0], [1], [0, 0, 1, 1], [], []>} : vector<16x128xf32>, vector<128x256xf32>, vector<16x256xf32> -> vector<16x256xf32>
    %13 = arith.addf %8, %12 : vector<16x256xf32>
    %c0_14 = arith.constant 0 : index
    %c0_15 = arith.constant 0 : index
    %14 = vector.load %arg2[%c0_14, %c0_15] : memref<1x256xf32, #tpu.memory_space<vmem>>, vector<1x256xf32>
    %15 = vector.broadcast %14 : vector<1x256xf32> to vector<16x256xf32>
    %16 = arith.addf %13, %15 : vector<16x256xf32>
    %cst_16 = arith.constant 0.000000e+00 : f32
    %17 = vector.broadcast %cst_16 : f32 to vector<16x256xf32>
    %18 = arith.maximumf %16, %17 : vector<16x256xf32>
    %cst_17 = arith.constant dense<0.000000e+00> : vector<256xf32>
    %19 = vector.multi_reduction <add>, %18, %cst_17 [0] : vector<16x256xf32> to vector<256xf32>
    %20 = vector.shape_cast %19 : vector<256xf32> to vector<1x256xf32>
    %21 = arith.mulf %18, %18 : vector<16x256xf32>
    %cst_18 = arith.constant dense<0.000000e+00> : vector<256xf32>
    %22 = vector.multi_reduction <add>, %21, %cst_18 [0] : vector<16x256xf32> to vector<256xf32>
    %23 = vector.shape_cast %22 : vector<256xf32> to vector<1x256xf32>
    %24 = tpu.concatenate %20, %23 in 0 : vector<1x256xf32>, vector<1x256xf32> -> vector<2x256xf32>
    %c0_19 = arith.constant 0 : index
    %c0_20 = arith.constant 0 : index
    %25 = vector.load %arg5[%c0_19, %c0_20] : memref<256x8xf32, #tpu.memory_space<vmem>>, vector<256x8xf32>
    %cst_21 = arith.constant dense<0.000000e+00> : vector<2x8xf32>
    %26 = tpu.matmul %24, %25, %cst_21 {dimension_numbers = #tpu.dot_dimension_numbers<[1], [0], [0], [1], [0, 0, 1, 1], [], []>} : vector<2x256xf32>, vector<256x8xf32>, vector<2x8xf32> -> vector<2x8xf32>
    %cst_22 = arith.constant 0.001953125 : f32
    %27 = vector.broadcast %cst_22 : f32 to vector<2x8xf32>
    %28 = arith.mulf %26, %27 : vector<2x8xf32>
    %29 = vector.extract_strided_slice %28 {offsets = [0, 0], sizes = [1, 8], strides = [1, 1]} : vector<2x8xf32> to vector<1x8xf32>
    %30 = vector.extract_strided_slice %28 {offsets = [1, 0], sizes = [1, 8], strides = [1, 1]} : vector<2x8xf32> to vector<1x8xf32>
    %31 = arith.mulf %29, %29 : vector<1x8xf32>
    %32 = arith.subf %30, %31 : vector<1x8xf32>
    %cst_23 = arith.constant 0.000000e+00 : f32
    %33 = vector.broadcast %cst_23 : f32 to vector<1x8xf32>
    %34 = arith.maximumf %32, %33 : vector<1x8xf32>
    %cst_24 = arith.constant 9.99999974E-6 : f32
    %35 = vector.broadcast %cst_24 : f32 to vector<1x8xf32>
    %36 = arith.addf %34, %35 : vector<1x8xf32>
    %37 = math.rsqrt %36 : vector<1x8xf32>
    %38 = tpu.concatenate %37, %29 in 0 : vector<1x8xf32>, vector<1x8xf32> -> vector<2x8xf32>
    %c0_25 = arith.constant 0 : index
    %c0_26 = arith.constant 0 : index
    %39 = vector.load %arg6[%c0_25, %c0_26] : memref<8x256xf32, #tpu.memory_space<vmem>>, vector<8x256xf32>
    %cst_27 = arith.constant dense<0.000000e+00> : vector<2x256xf32>
    %40 = tpu.matmul %38, %39, %cst_27 {dimension_numbers = #tpu.dot_dimension_numbers<[1], [0], [0], [1], [0, 0, 1, 1], [], []>} : vector<2x8xf32>, vector<8x256xf32>, vector<2x256xf32> -> vector<2x256xf32>
    %41 = vector.extract_strided_slice %40 {offsets = [0, 0], sizes = [1, 256], strides = [1, 1]} : vector<2x256xf32> to vector<1x256xf32>
    %c0_28 = arith.constant 0 : index
    %c0_29 = arith.constant 0 : index
    %42 = vector.load %arg3[%c0_28, %c0_29] : memref<1x256xf32, #tpu.memory_space<vmem>>, vector<1x256xf32>
    %43 = arith.mulf %41, %42 : vector<1x256xf32>
    %c0_30 = arith.constant 0 : index
    %c0_31 = arith.constant 0 : index
    %44 = vector.load %arg4[%c0_30, %c0_31] : memref<1x256xf32, #tpu.memory_space<vmem>>, vector<1x256xf32>
    %45 = vector.extract_strided_slice %40 {offsets = [1, 0], sizes = [1, 256], strides = [1, 1]} : vector<2x256xf32> to vector<1x256xf32>
    %46 = arith.mulf %45, %43 : vector<1x256xf32>
    %47 = arith.subf %44, %46 : vector<1x256xf32>
    %cst_32 = arith.constant 0.000000e+00 : f32
    %48 = vector.broadcast %cst_32 : f32 to vector<1x256xf32>
    %c0_33 = arith.constant 0 : index
    %c0_34 = arith.constant 0 : index
    %49 = vector.load %arg14[%c0_33, %c0_34] : memref<18x256xf32, #tpu.memory_space<vmem>>, vector<1x256xf32>
    tpu.vector_store %arg14[%c0_33, %c0_34], %48 {strides = array<i32>} : memref<18x256xf32, #tpu.memory_space<vmem>>, vector<1x256xf32>,
    %c17 = arith.constant 17 : index
    %c0_35 = arith.constant 0 : index
    %50 = vector.load %arg14[%c17, %c0_35] : memref<18x256xf32, #tpu.memory_space<vmem>>, vector<1x256xf32>
    tpu.vector_store %arg14[%c17, %c0_35], %48 {strides = array<i32>} : memref<18x256xf32, #tpu.memory_space<vmem>>, vector<1x256xf32>,
    %51 = vector.broadcast %43 : vector<1x256xf32> to vector<16x256xf32>
    %52 = arith.mulf %18, %51 : vector<16x256xf32>
    %53 = vector.broadcast %47 : vector<1x256xf32> to vector<16x256xf32>
    %54 = arith.addf %52, %53 : vector<16x256xf32>
    %c1_36 = arith.constant 1 : index
    %c0_37 = arith.constant 0 : index
    %55 = vector.load %arg14[%c1_36, %c0_37] : memref<18x256xf32, #tpu.memory_space<vmem>>, vector<16x256xf32>
    tpu.vector_store %arg14[%c1_36, %c0_37], %54 {strides = array<i32>} : memref<18x256xf32, #tpu.memory_space<vmem>>, vector<16x256xf32>,
    %c0_38 = arith.constant 0 : index
    %c0_39 = arith.constant 0 : index
    %56 = vector.load %arg14[%c0_38, %c0_39] : memref<18x256xf32, #tpu.memory_space<vmem>>, vector<16x256xf32>
    %c0_40 = arith.constant 0 : index
    %c0_41 = arith.constant 0 : index
    %c0_42 = arith.constant 0 : index
    %57 = vector.load %arg7[%c0_40, %c0_41, %c0_42] : memref<3x256x256xf32, #tpu.memory_space<vmem>>, vector<1x256x256xf32>
    %58 = vector.shape_cast %57 : vector<1x256x256xf32> to vector<256x256xf32>
    %cst_43 = arith.constant dense<0.000000e+00> : vector<16x256xf32>
    %59 = tpu.matmul %56, %58, %cst_43 {dimension_numbers = #tpu.dot_dimension_numbers<[1], [0], [0], [1], [0, 0, 1, 1], [], []>} : vector<16x256xf32>, vector<256x256xf32>, vector<16x256xf32> -> vector<16x256xf32>
    %c1_44 = arith.constant 1 : index
    %c0_45 = arith.constant 0 : index
    %60 = vector.load %arg14[%c1_44, %c0_45] : memref<18x256xf32, #tpu.memory_space<vmem>>, vector<16x256xf32>
    %c1_46 = arith.constant 1 : index
    %c0_47 = arith.constant 0 : index
    %c0_48 = arith.constant 0 : index
    %61 = vector.load %arg7[%c1_46, %c0_47, %c0_48] : memref<3x256x256xf32, #tpu.memory_space<vmem>>, vector<1x256x256xf32>
    %62 = vector.shape_cast %61 : vector<1x256x256xf32> to vector<256x256xf32>
    %cst_49 = arith.constant dense<0.000000e+00> : vector<16x256xf32>
    %63 = tpu.matmul %60, %62, %cst_49 {dimension_numbers = #tpu.dot_dimension_numbers<[1], [0], [0], [1], [0, 0, 1, 1], [], []>} : vector<16x256xf32>, vector<256x256xf32>, vector<16x256xf32> -> vector<16x256xf32>
    %64 = arith.addf %59, %63 : vector<16x256xf32>
    %c2_50 = arith.constant 2 : index
    %c0_51 = arith.constant 0 : index
    %65 = vector.load %arg14[%c2_50, %c0_51] : memref<18x256xf32, #tpu.memory_space<vmem>>, vector<16x256xf32>
    %c2_52 = arith.constant 2 : index
    %c0_53 = arith.constant 0 : index
    %c0_54 = arith.constant 0 : index
    %66 = vector.load %arg7[%c2_52, %c0_53, %c0_54] : memref<3x256x256xf32, #tpu.memory_space<vmem>>, vector<1x256x256xf32>
    %67 = vector.shape_cast %66 : vector<1x256x256xf32> to vector<256x256xf32>
    %cst_55 = arith.constant dense<0.000000e+00> : vector<16x256xf32>
    %68 = tpu.matmul %65, %67, %cst_55 {dimension_numbers = #tpu.dot_dimension_numbers<[1], [0], [0], [1], [0, 0, 1, 1], [], []>} : vector<16x256xf32>, vector<256x256xf32>, vector<16x256xf32> -> vector<16x256xf32>
    %69 = arith.addf %64, %68 : vector<16x256xf32>
    %c0_56 = arith.constant 0 : index
    %c0_57 = arith.constant 0 : index
    %70 = vector.load %arg8[%c0_56, %c0_57] : memref<1x256xf32, #tpu.memory_space<vmem>>, vector<1x256xf32>
    %71 = vector.broadcast %70 : vector<1x256xf32> to vector<16x256xf32>
    %72 = arith.addf %69, %71 : vector<16x256xf32>
    %cst_58 = arith.constant 0.000000e+00 : f32
    %73 = vector.broadcast %cst_58 : f32 to vector<16x256xf32>
    %74 = arith.maximumf %72, %73 : vector<16x256xf32>
    %cst_59 = arith.constant dense<0.000000e+00> : vector<256xf32>
    %75 = vector.multi_reduction <add>, %74, %cst_59 [0] : vector<16x256xf32> to vector<256xf32>
    %76 = vector.shape_cast %75 : vector<256xf32> to vector<1x256xf32>
    %77 = arith.mulf %74, %74 : vector<16x256xf32>
    %cst_60 = arith.constant dense<0.000000e+00> : vector<256xf32>
    %78 = vector.multi_reduction <add>, %77, %cst_60 [0] : vector<16x256xf32> to vector<256xf32>
    %79 = vector.shape_cast %78 : vector<256xf32> to vector<1x256xf32>
    %80 = tpu.concatenate %76, %79 in 0 : vector<1x256xf32>, vector<1x256xf32> -> vector<2x256xf32>
    %c0_61 = arith.constant 0 : index
    %c0_62 = arith.constant 0 : index
    %81 = vector.load %arg11[%c0_61, %c0_62] : memref<256x8xf32, #tpu.memory_space<vmem>>, vector<256x8xf32>
    %cst_63 = arith.constant dense<0.000000e+00> : vector<2x8xf32>
    %82 = tpu.matmul %80, %81, %cst_63 {dimension_numbers = #tpu.dot_dimension_numbers<[1], [0], [0], [1], [0, 0, 1, 1], [], []>} : vector<2x256xf32>, vector<256x8xf32>, vector<2x8xf32> -> vector<2x8xf32>
    %cst_64 = arith.constant 0.001953125 : f32
    %83 = vector.broadcast %cst_64 : f32 to vector<2x8xf32>
    %84 = arith.mulf %82, %83 : vector<2x8xf32>
    %85 = vector.extract_strided_slice %84 {offsets = [0, 0], sizes = [1, 8], strides = [1, 1]} : vector<2x8xf32> to vector<1x8xf32>
    %86 = vector.extract_strided_slice %84 {offsets = [1, 0], sizes = [1, 8], strides = [1, 1]} : vector<2x8xf32> to vector<1x8xf32>
    %87 = arith.mulf %85, %85 : vector<1x8xf32>
    %88 = arith.subf %86, %87 : vector<1x8xf32>
    %cst_65 = arith.constant 0.000000e+00 : f32
    %89 = vector.broadcast %cst_65 : f32 to vector<1x8xf32>
    %90 = arith.maximumf %88, %89 : vector<1x8xf32>
    %cst_66 = arith.constant 9.99999974E-6 : f32
    %91 = vector.broadcast %cst_66 : f32 to vector<1x8xf32>
    %92 = arith.addf %90, %91 : vector<1x8xf32>
    %93 = math.rsqrt %92 : vector<1x8xf32>
    %94 = tpu.concatenate %93, %85 in 0 : vector<1x8xf32>, vector<1x8xf32> -> vector<2x8xf32>
    %c0_67 = arith.constant 0 : index
    %c0_68 = arith.constant 0 : index
    %95 = vector.load %arg12[%c0_67, %c0_68] : memref<8x256xf32, #tpu.memory_space<vmem>>, vector<8x256xf32>
    %cst_69 = arith.constant dense<0.000000e+00> : vector<2x256xf32>
    %96 = tpu.matmul %94, %95, %cst_69 {dimension_numbers = #tpu.dot_dimension_numbers<[1], [0], [0], [1], [0, 0, 1, 1], [], []>} : vector<2x8xf32>, vector<8x256xf32>, vector<2x256xf32> -> vector<2x256xf32>
    %97 = vector.extract_strided_slice %96 {offsets = [0, 0], sizes = [1, 256], strides = [1, 1]} : vector<2x256xf32> to vector<1x256xf32>
    %c0_70 = arith.constant 0 : index
    %c0_71 = arith.constant 0 : index
    %98 = vector.load %arg9[%c0_70, %c0_71] : memref<1x256xf32, #tpu.memory_space<vmem>>, vector<1x256xf32>
    %99 = arith.mulf %97, %98 : vector<1x256xf32>
    %c0_72 = arith.constant 0 : index
    %c0_73 = arith.constant 0 : index
    %100 = vector.load %arg10[%c0_72, %c0_73] : memref<1x256xf32, #tpu.memory_space<vmem>>, vector<1x256xf32>
    %101 = vector.extract_strided_slice %96 {offsets = [1, 0], sizes = [1, 256], strides = [1, 1]} : vector<2x256xf32> to vector<1x256xf32>
    %102 = arith.mulf %101, %99 : vector<1x256xf32>
    %103 = arith.subf %100, %102 : vector<1x256xf32>
    %104 = vector.broadcast %99 : vector<1x256xf32> to vector<16x256xf32>
    %105 = arith.mulf %74, %104 : vector<16x256xf32>
    %106 = vector.broadcast %103 : vector<1x256xf32> to vector<16x256xf32>
    %107 = arith.addf %105, %106 : vector<16x256xf32>
    %c0_74 = arith.constant 0 : index
    %c0_75 = arith.constant 0 : index
    %108 = vector.load %arg13[%c0_74, %c0_75] : memref<16x256xf32, #tpu.memory_space<vmem>>, vector<16x256xf32>
    tpu.vector_store %arg13[%c0_74, %c0_75], %107 {strides = array<i32>} : memref<16x256xf32, #tpu.memory_space<vmem>>, vector<16x256xf32>,
    return
  }
}

</mosaic_0001>

<llo_original>
// kernel: stacked_conv.1
$region0: #{stacked_conv.1}
  #allocation0 [shape = 'u32[]', space=smem, size = 0x4, offset = 0x4, fixed_abs, tag = 'smem constant byte address 0x4 - core index']
  #allocation1 [shape = 'u32[144,128]{1,0:T(1,128)}', space=vmem, size = 0x12000, scoped, tag = 'internal scratch']
  #allocation2 [shape = 'f32[18,256]{1,0:T(8,128)}', space=vmem, size = 0x6000, scoped, tag = 'scratch operand']
  %s0 = inlined_call_operand.vmem [shape: f32[18,128], index: 0, kind: input, shape index: {}]
  %s1 = inlined_call_operand.vmem [shape: f32[3,128,256], index: 1, kind: input, shape index: {}]
  %s2 = inlined_call_operand.vmem [shape: f32[1,256], index: 2, kind: input, shape index: {}]
  %s3 = inlined_call_operand.vmem [shape: f32[1,256], index: 3, kind: input, shape index: {}]
  %s4 = inlined_call_operand.vmem [shape: f32[1,256], index: 4, kind: input, shape index: {}]
  %s5 = inlined_call_operand.vmem [shape: f32[256,8], index: 5, kind: input, shape index: {}, may-alias: {5,11}]
  %s6 = inlined_call_operand.vmem [shape: f32[8,256], index: 6, kind: input, shape index: {}, may-alias: {6,12}]
  %s7 = inlined_call_operand.vmem [shape: f32[3,256,256], index: 7, kind: input, shape index: {}]
  %s8 = inlined_call_operand.vmem [shape: f32[1,256], index: 8, kind: input, shape index: {}]
  %s9 = inlined_call_operand.vmem [shape: f32[1,256], index: 9, kind: input, shape index: {}]
  %s10 = inlined_call_operand.vmem [shape: f32[1,256], index: 10, kind: input, shape index: {}]
  %s11 = inlined_call_operand.vmem [shape: f32[256,8], index: 11, kind: input, shape index: {}, may-alias: {5,11}]
  %s12 = inlined_call_operand.vmem [shape: f32[8,256], index: 12, kind: input, shape index: {}, may-alias: {6,12}]
  %s13 = inlined_call_operand.vmem [shape: f32[16,256], index: 13, kind: output, shape index: {}]
  %s14 = sld [smem:[#allocation0]]
  $region62: #{stacked_conv.1} parent=0
    _
  %s16 = ssub.s32 1, %s14
  %s17 = scalar_select 0, %s16, %s14
  // Predicated region
  $region2: #{stacked_conv.1} parent=0 // pred_check
    _
  $region3: #{stacked_conv.1} parent=0 // pred_check_branch
    %19 = sbr.rel (0) target = $region5
  $region4: #{stacked_conv.1} parent=0 // pred_region
    _
  $region5: #{stacked_conv.1} parent=0 // pred_fallthru
    _
  // Predicated region
  $region6: #{stacked_conv.1} parent=0 // pred_check
    _
  $region7: #{stacked_conv.1} parent=0 // pred_check_branch
    %21 = sbr.rel (0) target = $region9
  $region8: #{stacked_conv.1} parent=0 // pred_region
    _
  $region9: #{stacked_conv.1} parent=0 // pred_fallthru
    _
  // Predicated region
  $region10: #{stacked_conv.1} parent=0 // pred_check
    _
  $region11: #{stacked_conv.1} parent=0 // pred_check_branch
    %23 = sbr.rel (0) target = $region13
  $region12: #{stacked_conv.1} parent=0 // pred_region
    _
  $region13: #{stacked_conv.1} parent=0 // pred_fallthru
    _
  // Predicated region
  $region14: #{stacked_conv.1} parent=0 // pred_check
    _
  $region15: #{stacked_conv.1} parent=0 // pred_check_branch
    %25 = sbr.rel (0) target = $region17
  $region16: #{stacked_conv.1} parent=0 // pred_region
    _
  $region17: #{stacked_conv.1} parent=0 // pred_fallthru
    _
  // Predicated region
  $region18: #{stacked_conv.1} parent=0 // pred_check
    _
  $region19: #{stacked_conv.1} parent=0 // pred_check_branch
    %27 = sbr.rel (0) target = $region21
  $region20: #{stacked_conv.1} parent=0 // pred_region
    _
  $region21: #{stacked_conv.1} parent=0 // pred_fallthru
    _
  // Predicated region
  $region22: #{stacked_conv.1} parent=0 // pred_check
    _
  $region23: #{stacked_conv.1} parent=0 // pred_check_branch
    %29 = sbr.rel (0) target = $region25
  $region24: #{stacked_conv.1} parent=0 // pred_region
    _
  $region25: #{stacked_conv.1} parent=0 // pred_fallthru
    _
  // Predicated region
  $region26: #{stacked_conv.1} parent=0 // pred_check
    _
  $region27: #{stacked_conv.1} parent=0 // pred_check_branch
    %31 = sbr.rel (0) target = $region29
  $region28: #{stacked_conv.1} parent=0 // pred_region
    _
  $region29: #{stacked_conv.1} parent=0 // pred_fallthru
    _
  // Predicated region
  $region30: #{stacked_conv.1} parent=0 // pred_check
    _
  $region31: #{stacked_conv.1} parent=0 // pred_check_branch
    %33 = sbr.rel (0) target = $region33
  $region32: #{stacked_conv.1} parent=0 // pred_region
    _
  $region33: #{stacked_conv.1} parent=0 // pred_fallthru
    _
  // Predicated region
  $region34: #{stacked_conv.1} parent=0 // pred_check
    _
  $region35: #{stacked_conv.1} parent=0 // pred_check_branch
    %35 = sbr.rel (0) target = $region37
  $region36: #{stacked_conv.1} parent=0 // pred_region
    _
  $region37: #{stacked_conv.1} parent=0 // pred_fallthru
    _
  // Predicated region
  $region38: #{stacked_conv.1} parent=0 // pred_check
    _
  $region39: #{stacked_conv.1} parent=0 // pred_check_branch
    %37 = sbr.rel (0) target = $region41
  $region40: #{stacked_conv.1} parent=0 // pred_region
    _
  $region41: #{stacked_conv.1} parent=0 // pred_fallthru
    _
  // Predicated region
  $region42: #{stacked_conv.1} parent=0 // pred_check
    _
  $region43: #{stacked_conv.1} parent=0 // pred_check_branch
    %39 = sbr.rel (0) target = $region45
  $region44: #{stacked_conv.1} parent=0 // pred_region
    _
  $region45: #{stacked_conv.1} parent=0 // pred_fallthru
    _
  // Predicated region
  $region46: #{stacked_conv.1} parent=0 // pred_check
    _
  $region47: #{stacked_conv.1} parent=0 // pred_check_branch
    %41 = sbr.rel (0) target = $region49
  $region48: #{stacked_conv.1} parent=0 // pred_region
    _
  $region49: #{stacked_conv.1} parent=0 // pred_fallthru
    _
  // Predicated region
  $region50: #{stacked_conv.1} parent=0 // pred_check
    _
  $region51: #{stacked_conv.1} parent=0 // pred_check_branch
    %43 = sbr.rel (0) target = $region53
  $region52: #{stacked_conv.1} parent=0 // pred_region
    _
  $region53: #{stacked_conv.1} parent=0 // pred_fallthru
    _
  %v44 = vld [vmem:[%s0] sm:$0xff]
  %v45 = vld [vmem:[%s0 + $0x8] sm:$0xff]
  %v46 = vld [vmem:[%s1] sm:$0xff]
  %v47 = vld [vmem:[%s1 + $0x8] sm:$0xff]
  %v48 = vld [vmem:[%s1 + $0x10] sm:$0xff]
  %v49 = vld [vmem:[%s1 + $0x18] sm:$0xff]
  %v50 = vld [vmem:[%s1 + $0x20] sm:$0xff]
  %v51 = vld [vmem:[%s1 + $0x28] sm:$0xff]
  %v52 = vld [vmem:[%s1 + $0x30] sm:$0xff]
  %v53 = vld [vmem:[%s1 + $0x38] sm:$0xff]
  %v54 = vld [vmem:[%s1 + $0x40] sm:$0xff]
  %v55 = vld [vmem:[%s1 + $0x48] sm:$0xff]
  %v56 = vld [vmem:[%s1 + $0x50] sm:$0xff]
  %v57 = vld [vmem:[%s1 + $0x58] sm:$0xff]
  %v58 = vld [vmem:[%s1 + $0x60] sm:$0xff]
  %v59 = vld [vmem:[%s1 + $0x68] sm:$0xff]
  %v60 = vld [vmem:[%s1 + $0x70] sm:$0xff]
  %v61 = vld [vmem:[%s1 + $0x78] sm:$0xff]
  %v62 = vld [vmem:[%s1 + $0x80] sm:$0xff]
  %v63 = vld [vmem:[%s1 + $0x88] sm:$0xff]
  %v64 = vld [vmem:[%s1 + $0x90] sm:$0xff]
  %v65 = vld [vmem:[%s1 + $0x98] sm:$0xff]
  %v66 = vld [vmem:[%s1 + $0xa0] sm:$0xff]
  %v67 = vld [vmem:[%s1 + $0xa8] sm:$0xff]
  %v68 = vld [vmem:[%s1 + $0xb0] sm:$0xff]
  %v69 = vld [vmem:[%s1 + $0xb8] sm:$0xff]
  %v70 = vld [vmem:[%s1 + $0xc0] sm:$0xff]
  %v71 = vld [vmem:[%s1 + $0xc8] sm:$0xff]
  %v72 = vld [vmem:[%s1 + $0xd0] sm:$0xff]
  %v73 = vld [vmem:[%s1 + $0xd8] sm:$0xff]
  %v74 = vld [vmem:[%s1 + $0xe0] sm:$0xff]
  %v75 = vld [vmem:[%s1 + $0xe8] sm:$0xff]
  %v76 = vld [vmem:[%s1 + $0xf0] sm:$0xff]
  %v77 = vld [vmem:[%s1 + $0xf8] sm:$0xff]
  %v78 = vld [vmem:[%s0 + $0x1] sm:$0xff]
  %v79 = vld [vmem:[%s0 + $0x9] sm:$0xff]
  %s80 = scalar_lea.vmem %s1, 256
  %v81 = vld [vmem:[%s80] sm:$0xff]
  %v82 = vld [vmem:[%s80 + $0x8] sm:$0xff]
  %v83 = vld [vmem:[%s80 + $0x10] sm:$0xff]
  %v84 = vld [vmem:[%s80 + $0x18] sm:$0xff]
  %v85 = vld [vmem:[%s80 + $0x20] sm:$0xff]
  %v86 = vld [vmem:[%s80 + $0x28] sm:$0xff]
  %v87 = vld [vmem:[%s80 + $0x30] sm:$0xff]
  %v88 = vld [vmem:[%s80 + $0x38] sm:$0xff]
  %v89 = vld [vmem:[%s80 + $0x40] sm:$0xff]
  %v90 = vld [vmem:[%s80 + $0x48] sm:$0xff]
  %v91 = vld [vmem:[%s80 + $0x50] sm:$0xff]
  %v92 = vld [vmem:[%s80 + $0x58] sm:$0xff]
  %v93 = vld [vmem:[%s80 + $0x60] sm:$0xff]
  %v94 = vld [vmem:[%s80 + $0x68] sm:$0xff]
  %v95 = vld [vmem:[%s80 + $0x70] sm:$0xff]
  %v96 = vld [vmem:[%s80 + $0x78] sm:$0xff]
  %v97 = vld [vmem:[%s80 + $0x80] sm:$0xff]
  %v98 = vld [vmem:[%s80 + $0x88] sm:$0xff]
  %v99 = vld [vmem:[%s80 + $0x90] sm:$0xff]
  %v100 = vld [vmem:[%s80 + $0x98] sm:$0xff]
  %v101 = vld [vmem:[%s80 + $0xa0] sm:$0xff]
  %v102 = vld [vmem:[%s80 + $0xa8] sm:$0xff]
  %v103 = vld [vmem:[%s80 + $0xb0] sm:$0xff]
  %v104 = vld [vmem:[%s80 + $0xb8] sm:$0xff]
  %v105 = vld [vmem:[%s80 + $0xc0] sm:$0xff]
  %v106 = vld [vmem:[%s80 + $0xc8] sm:$0xff]
  %v107 = vld [vmem:[%s80 + $0xd0] sm:$0xff]
  %v108 = vld [vmem:[%s80 + $0xd8] sm:$0xff]
  %v109 = vld [vmem:[%s80 + $0xe0] sm:$0xff]
  %v110 = vld [vmem:[%s80 + $0xe8] sm:$0xff]
  %v111 = vld [vmem:[%s80 + $0xf0] sm:$0xff]
  %v112 = vld [vmem:[%s80 + $0xf8] sm:$0xff]
  %113 = vmatprep.subr.mxu0 %v112
  %114 = vmatpush1.msra.mxu0 %v111
  %115 = vmatprep.subr.mxu0 %v110
  %116 = vmatpush1.msra.mxu0 %v109
  %117 = vmatprep.subr.mxu0 %v108
  %118 = vmatpush1.msra.mxu0 %v107
  %119 = vmatprep.subr.mxu0 %v106
  %120 = vmatpush1.msra.mxu0 %v105
  %121 = vmatprep.subr.mxu0 %v104
  %122 = vmatpush1.msra.mxu0 %v103
  %123 = vmatprep.subr.mxu0 %v102
  %124 = vmatpush1.msra.mxu0 %v101
  %125 = vmatprep.subr.mxu0 %v100
  %126 = vmatpush1.msra.mxu0 %v99
  %127 = vmatprep.subr.mxu0 %v98
  %128 = vmatpush1.msra.mxu0 %v97
  %129 = vmatprep.subr.mxu0 %v96
  %130 = vmatpush1.msra.mxu0 %v95
  %131 = vmatprep.subr.mxu0 %v94
  %132 = vmatpush1.msra.mxu0 %v93
  %133 = vmatprep.subr.mxu0 %v92
  %134 = vmatpush1.msra.mxu0 %v91
  %135 = vmatprep.subr.mxu0 %v90
  %136 = vmatpush1.msra.mxu0 %v89
  %137 = vmatprep.subr.mxu0 %v88
  %138 = vmatpush1.msra.mxu0 %v87
  %139 = vmatprep.subr.mxu0 %v86
  %140 = vmatpush1.msra.mxu0 %v85
  %141 = vmatprep.subr.mxu0 %v84
  %142 = vmatpush1.msra.mxu0 %v83
  %143 = vmatprep.subr.mxu0 %v82
  %144 = vmatpush1.msra.mxu0 %v81
  %145 = vmatprep.subr.mxu0 0.0
  %146 = vmatpush2.msra.mxu0 0.0
  %147 = vmatprep.subr.mxu0 0.0
  %148 = vmatpush2.msra.mxu0 0.0
  %149 = vmatprep.subr.mxu0 0.0
  %150 = vmatpush2.msra.mxu0 0.0
  %151 = vmatprep.subr.mxu0 0.0
  %152 = vmatpush2.msra.mxu0 0.0
  %153 = vmatprep.subr.mxu0 0.0
  %154 = vmatpush2.msra.mxu0 0.0
  %155 = vmatprep.subr.mxu0 0.0
  %156 = vmatpush2.msra.mxu0 0.0
  %157 = vmatprep.subr.mxu0 0.0
  %158 = vmatpush2.msra.mxu0 0.0
  %159 = vmatprep.subr.mxu0 0.0
  %160 = vmatpush2.msra.mxu0 0.0
  %161 = vmatprep.subr.mxu0 0.0
  %162 = vmatpush2.msra.mxu0 0.0
  %163 = vmatprep.subr.mxu0 0.0
  %164 = vmatpush2.msra.mxu0 0.0
  %165 = vmatprep.subr.mxu0 0.0
  %166 = vmatpush2.msra.mxu0 0.0
  %167 = vmatprep.subr.mxu0 0.0
  %168 = vmatpush2.msra.mxu0 0.0
  %169 = vmatprep.subr.mxu0 0.0
  %170 = vmatpush2.msra.mxu0 0.0
  %171 = vmatprep.subr.mxu0 0.0
  %172 = vmatpush2.msra.mxu0 0.0
  %173 = vmatprep.subr.mxu0 0.0
  %174 = vmatpush2.msra.mxu0 0.0
  %175 = vmatprep.subr.mxu0 0.0
  %176 = vmatpush2.msra.mxu0 0.0
  %177 = vmatprep.mubr.f32.mxu0 0.0
  %178 = vmatmul.mubr.f32.gmra.mxu0 %v78
  %v179 = vpop.f32.mrf.mxu0
  %v180 = vadd.f32 0.0, %v179
  %v181 = vpop.f32.mrf.mxu0
  %v182 = vadd.f32 0.0, %v181
  %183 = vmatprep.mubr.f32.mxu0 0.0
  %184 = vmatmul.mubr.f32.gmra.mxu0 %v79
  %v185 = vpop.f32.mrf.mxu0
  %v186 = vadd.f32 0.0, %v185
  %v187 = vpop.f32.mrf.mxu0
  %v188 = vadd.f32 0.0, %v187
  %189 = vdwg.mxu0
  %190 = vmatprep.subr.mxu0 %v77
  %191 = vmatpush1.msra.mxu0 %v76
  %192 = vmatprep.subr.mxu0 %v75
  %193 = vmatpush1.msra.mxu0 %v74
  %194 = vmatprep.subr.mxu0 %v73
  %195 = vmatpush1.msra.mxu0 %v72
  %196 = vmatprep.subr.mxu0 %v71
  %197 = vmatpush1.msra.mxu0 %v70
  %198 = vmatprep.subr.mxu0 %v69
  %199 = vmatpush1.msra.mxu0 %v68
  %200 = vmatprep.subr.mxu0 %v67
  %201 = vmatpush1.msra.mxu0 %v66
  %202 = vmatprep.subr.mxu0 %v65
  %203 = vmatpush1.msra.mxu0 %v64
  %204 = vmatprep.subr.mxu0 %v63
  %205 = vmatpush1.msra.mxu0 %v62
  %206 = vmatprep.subr.mxu0 %v61
  %207 = vmatpush1.msra.mxu0 %v60
  %208 = vmatprep.subr.mxu0 %v59
  %209 = vmatpush1.msra.mxu0 %v58
  %210 = vmatprep.subr.mxu0 %v57
  %211 = vmatpush1.msra.mxu0 %v56
  %212 = vmatprep.subr.mxu0 %v55
  %213 = vmatpush1.msra.mxu0 %v54
  %214 = vmatprep.subr.mxu0 %v53
  %215 = vmatpush1.msra.mxu0 %v52
  %216 = vmatprep.subr.mxu0 %v51
  %217 = vmatpush1.msra.mxu0 %v50
  %218 = vmatprep.subr.mxu0 %v49
  %219 = vmatpush1.msra.mxu0 %v48
  %220 = vmatprep.subr.mxu0 %v47
  %221 = vmatpush1.msra.mxu0 %v46
  %222 = vmatprep.subr.mxu0 0.0
  %223 = vmatpush2.msra.mxu0 0.0
  %224 = vmatprep.subr.mxu0 0.0
  %225 = vmatpush2.msra.mxu0 0.0
  %226 = vmatprep.subr.mxu0 0.0
  %227 = vmatpush2.msra.mxu0 0.0
  %228 = vmatprep.subr.mxu0 0.0
  %229 = vmatpush2.msra.mxu0 0.0
  %230 = vmatprep.subr.mxu0 0.0
  %231 = vmatpush2.msra.mxu0 0.0
  %232 = vmatprep.subr.mxu0 0.0
  %233 = vmatpush2.msra.mxu0 0.0
  %234 = vmatprep.subr.mxu0 0.0
  %235 = vmatpush2.msra.mxu0 0.0
  %236 = vmatprep.subr.mxu0 0.0
  %237 = vmatpush2.msra.mxu0 0.0
  %238 = vmatprep.subr.mxu0 0.0
  %239 = vmatpush2.msra.mxu0 0.0
  %240 = vmatprep.subr.mxu0 0.0
  %241 = vmatpush2.msra.mxu0 0.0
  %242 = vmatprep.subr.mxu0 0.0
  %243 = vmatpush2.msra.mxu0 0.0
  %244 = vmatprep.subr.mxu0 0.0
  %245 = vmatpush2.msra.mxu0 0.0
  %246 = vmatprep.subr.mxu0 0.0
  %247 = vmatpush2.msra.mxu0 0.0
  %248 = vmatprep.subr.mxu0 0.0
  %249 = vmatpush2.msra.mxu0 0.0
  %250 = vmatprep.subr.mxu0 0.0
  %251 = vmatpush2.msra.mxu0 0.0
  %252 = vmatprep.subr.mxu0 0.0
  %253 = vmatpush2.msra.mxu0 0.0
  %254 = vmatprep.mubr.f32.mxu0 0.0
  %255 = vmatmul.mubr.f32.gmra.mxu0 %v44
  %v256 = vpop.f32.mrf.mxu0
  %v257 = vadd.f32 %v180, %v256
  %v258 = vpop.f32.mrf.mxu0
  %v259 = vadd.f32 %v182, %v258
  %260 = vmatprep.mubr.f32.mxu0 0.0
  %261 = vmatmul.mubr.f32.gmra.mxu0 %v45
  %v262 = vpop.f32.mrf.mxu0
  %v263 = vadd.f32 %v186, %v262
  %v264 = vpop.f32.mrf.mxu0
  %v265 = vadd.f32 %v188, %v264
  %266 = vdwg.mxu0
  %v267 = vld [vmem:[%s0 + $0x2] sm:$0xff]
  %v268 = vld [vmem:[%s0 + $0xa] sm:$0xff]
  %s269 = scalar_lea.vmem %s1, 512
  %v270 = vld [vmem:[%s269] sm:$0xff]
  %v271 = vld [vmem:[%s269 + $0x8] sm:$0xff]
  %v272 = vld [vmem:[%s269 + $0x10] sm:$0xff]
  %v273 = vld [vmem:[%s269 + $0x18] sm:$0xff]
  %v274 = vld [vmem:[%s269 + $0x20] sm:$0xff]
  %v275 = vld [vmem:[%s269 + $0x28] sm:$0xff]
  %v276 = vld [vmem:[%s269 + $0x30] sm:$0xff]
  %v277 = vld [vmem:[%s269 + $0x38] sm:$0xff]
  %v278 = vld [vmem:[%s269 + $0x40] sm:$0xff]
  %v279 = vld [vmem:[%s269 + $0x48] sm:$0xff]
  %v280 = vld [vmem:[%s269 + $0x50] sm:$0xff]
  %v281 = vld [vmem:[%s269 + $0x58] sm:$0xff]
  %v282 = vld [vmem:[%s269 + $0x60] sm:$0xff]
  %v283 = vld [vmem:[%s269 + $0x68] sm:$0xff]
  %v284 = vld [vmem:[%s269 + $0x70] sm:$0xff]
  %v285 = vld [vmem:[%s269 + $0x78] sm:$0xff]
  %v286 = vld [vmem:[%s269 + $0x80] sm:$0xff]
  %v287 = vld [vmem:[%s269 + $0x88] sm:$0xff]
  %v288 = vld [vmem:[%s269 + $0x90] sm:$0xff]
  %v289 = vld [vmem:[%s269 + $0x98] sm:$0xff]
  %v290 = vld [vmem:[%s269 + $0xa0] sm:$0xff]
  %v291 = vld [vmem:[%s269 + $0xa8] sm:$0xff]
  %v292 = vld [vmem:[%s269 + $0xb0] sm:$0xff]
  %v293 = vld [vmem:[%s269 + $0xb8] sm:$0xff]
  %v294 = vld [vmem:[%s269 + $0xc0] sm:$0xff]
  %v295 = vld [vmem:[%s269 + $0xc8] sm:$0xff]
  %v296 = vld [vmem:[%s269 + $0xd0] sm:$0xff]
  %v297 = vld [vmem:[%s269 + $0xd8] sm:$0xff]
  %v298 = vld [vmem:[%s269 + $0xe0] sm:$0xff]
  %v299 = vld [vmem:[%s269 + $0xe8] sm:$0xff]
  %v300 = vld [vmem:[%s269 + $0xf0] sm:$0xff]
  %v301 = vld [vmem:[%s269 + $0xf8] sm:$0xff]
  %302 = vmatprep.subr.mxu0 %v301
  %303 = vmatpush1.msra.mxu0 %v300
  %304 = vmatprep.subr.mxu0 %v299
  %305 = vmatpush1.msra.mxu0 %v298
  %306 = vmatprep.subr.mxu0 %v297
  %307 = vmatpush1.msra.mxu0 %v296
  %308 = vmatprep.subr.mxu0 %v295
  %309 = vmatpush1.msra.mxu0 %v294
  %310 = vmatprep.subr.mxu0 %v293
  %311 = vmatpush1.msra.mxu0 %v292
  %312 = vmatprep.subr.mxu0 %v291
  %313 = vmatpush1.msra.mxu0 %v290
  %314 = vmatprep.subr.mxu0 %v289
  %315 = vmatpush1.msra.mxu0 %v288
  %316 = vmatprep.subr.mxu0 %v287
  %317 = vmatpush1.msra.mxu0 %v286
  %318 = vmatprep.subr.mxu0 %v285
  %319 = vmatpush1.msra.mxu0 %v284
  %320 = vmatprep.subr.mxu0 %v283
  %321 = vmatpush1.msra.mxu0 %v282
  %322 = vmatprep.subr.mxu0 %v281
  %323 = vmatpush1.msra.mxu0 %v280
  %324 = vmatprep.subr.mxu0 %v279
  %325 = vmatpush1.msra.mxu0 %v278
  %326 = vmatprep.subr.mxu0 %v277
  %327 = vmatpush1.msra.mxu0 %v276
  %328 = vmatprep.subr.mxu0 %v275
  %329 = vmatpush1.msra.mxu0 %v274
  %330 = vmatprep.subr.mxu0 %v273
  %331 = vmatpush1.msra.mxu0 %v272
  %332 = vmatprep.subr.mxu0 %v271
  %333 = vmatpush1.msra.mxu0 %v270
  %334 = vmatprep.subr.mxu0 0.0
  %335 = vmatpush2.msra.mxu0 0.0
  %336 = vmatprep.subr.mxu0 0.0
  %337 = vmatpush2.msra.mxu0 0.0
  %338 = vmatprep.subr.mxu0 0.0
  %339 = vmatpush2.msra.mxu0 0.0
  %340 = vmatprep.subr.mxu0 0.0
  %341 = vmatpush2.msra.mxu0 0.0
  %342 = vmatprep.subr.mxu0 0.0
  %343 = vmatpush2.msra.mxu0 0.0
  %344 = vmatprep.subr.mxu0 0.0
  %345 = vmatpush2.msra.mxu0 0.0
  %346 = vmatprep.subr.mxu0 0.0
  %347 = vmatpush2.msra.mxu0 0.0
  %348 = vmatprep.subr.mxu0 0.0
  %349 = vmatpush2.msra.mxu0 0.0
  %350 = vmatprep.subr.mxu0 0.0
  %351 = vmatpush2.msra.mxu0 0.0
  %352 = vmatprep.subr.mxu0 0.0
  %353 = vmatpush2.msra.mxu0 0.0
  %354 = vmatprep.subr.mxu0 0.0
  %355 = vmatpush2.msra.mxu0 0.0
  %356 = vmatprep.subr.mxu0 0.0
  %357 = vmatpush2.msra.mxu0 0.0
  %358 = vmatprep.subr.mxu0 0.0
  %359 = vmatpush2.msra.mxu0 0.0
  %360 = vmatprep.subr.mxu0 0.0
  %361 = vmatpush2.msra.mxu0 0.0
  %362 = vmatprep.subr.mxu0 0.0
  %363 = vmatpush2.msra.mxu0 0.0
  %364 = vmatprep.subr.mxu0 0.0
  %365 = vmatpush2.msra.mxu0 0.0
  %366 = vmatprep.mubr.f32.mxu0 0.0
  %367 = vmatmul.mubr.f32.gmra.mxu0 %v267
  %v368 = vpop.f32.mrf.mxu0
  %v369 = vadd.f32 0.0, %v368
  %v370 = vpop.f32.mrf.mxu0
  %v371 = vadd.f32 0.0, %v370
  %372 = vmatprep.mubr.f32.mxu0 0.0
  %373 = vmatmul.mubr.f32.gmra.mxu0 %v268
  %v374 = vpop.f32.mrf.mxu0
  %v375 = vadd.f32 0.0, %v374
  %v376 = vpop.f32.mrf.mxu0
  %v377 = vadd.f32 0.0, %v376
  %378 = vdwg.mxu0
  %v379 = vadd.f32 %v257, %v369
  %v380 = vadd.f32 %v259, %v371
  %v381 = vadd.f32 %v263, %v375
  %v382 = vadd.f32 %v265, %v377
  %v383 = vld [vmem:[%s2] sm:$0x3]
  %v385 = vlaneseq
  %v386 = vshrl.u32 %v385, 7
  %v387 = vsub.s32 0, %v386
  %v388 = vrot.slane %v383, %v387
  %v389 = vlaneseq
  %v390 = vshrl.u32 %v389, 7
  %v391 = vsub.s32 1, %v390
  %v392 = vrot.slane %v383, %v391
  %v395 = vadd.f32 %v379, %v388
  %v396 = vadd.f32 %v380, %v392
  %v397 = vadd.f32 %v381, %v388
  %v398 = vadd.f32 %v382, %v392
  %v399 = vmax.f32 %v395, 0.0
  %v400 = vmax.f32 %v396, 0.0
  %v401 = vmax.f32 %v397, 0.0
  %v402 = vmax.f32 %v398, 0.0
  %v403 = vadd.f32 %v399, %v401
  %v404 = vrot.slane %v403, 4
  %v405 = vadd.f32 %v403, %v404
  %v406 = vrot.slane %v405, 2
  %v407 = vadd.f32 %v405, %v406
  %v408 = vrot.slane %v407, 1
  %v409 = vadd.f32 %v407, %v408
  %v410 = vadd.f32 %v400, %v402
  %v411 = vrot.slane %v410, 4
  %v412 = vadd.f32 %v410, %v411
  %v413 = vrot.slane %v412, 2
  %v414 = vadd.f32 %v412, %v413
  %v415 = vrot.slane %v414, 1
  %v416 = vadd.f32 %v414, %v415
  %v417 = vmul.f32 %v399, %v399
  %v418 = vmul.f32 %v400, %v400
  %v419 = vmul.f32 %v401, %v401
  %v420 = vmul.f32 %v402, %v402
  %v421 = vadd.f32 %v417, %v419
  %v422 = vrot.slane %v421, 4
  %v423 = vadd.f32 %v421, %v422
  %v424 = vrot.slane %v423, 2
  %v425 = vadd.f32 %v423, %v424
  %v426 = vrot.slane %v425, 1
  %v427 = vadd.f32 %v425, %v426
  %v428 = vadd.f32 %v418, %v420
  %v429 = vrot.slane %v428, 4
  %v430 = vadd.f32 %v428, %v429
  %v431 = vrot.slane %v430, 2
  %v432 = vadd.f32 %v430, %v431
  %v433 = vrot.slane %v432, 1
  %v434 = vadd.f32 %v432, %v433
  %vm435 = vcmask 1040384
  %v436 = vsel %vm435, %v409, %v427
  %v437 = vsel %vm435, %v416, %v434
  %v438 = vld [vmem:[%s5] sm:$0xff]
  %v439 = vld [vmem:[%s5 + $0x8] sm:$0xff]
  %v440 = vld [vmem:[%s5 + $0x10] sm:$0xff]
  %v441 = vld [vmem:[%s5 + $0x18] sm:$0xff]
  %v442 = vld [vmem:[%s5 + $0x20] sm:$0xff]
  %v443 = vld [vmem:[%s5 + $0x28] sm:$0xff]
  %v444 = vld [vmem:[%s5 + $0x30] sm:$0xff]
  %v445 = vld [vmem:[%s5 + $0x38] sm:$0xff]
  %v446 = vld [vmem:[%s5 + $0x40] sm:$0xff]
  %v447 = vld [vmem:[%s5 + $0x48] sm:$0xff]
  %v448 = vld [vmem:[%s5 + $0x50] sm:$0xff]
  %v449 = vld [vmem:[%s5 + $0x58] sm:$0xff]
  %v450 = vld [vmem:[%s5 + $0x60] sm:$0xff]
  %v451 = vld [vmem:[%s5 + $0x68] sm:$0xff]
  %v452 = vld [vmem:[%s5 + $0x70] sm:$0xff]
  %v453 = vld [vmem:[%s5 + $0x78] sm:$0xff]
  %v454 = vld [vmem:[%s5 + $0x80] sm:$0xff]
  %v455 = vld [vmem:[%s5 + $0x88] sm:$0xff]
  %v456 = vld [vmem:[%s5 + $0x90] sm:$0xff]
  %v457 = vld [vmem:[%s5 + $0x98] sm:$0xff]
  %v458 = vld [vmem:[%s5 + $0xa0] sm:$0xff]
  %v459 = vld [vmem:[%s5 + $0xa8] sm:$0xff]
  %v460 = vld [vmem:[%s5 + $0xb0] sm:$0xff]
  %v461 = vld [vmem:[%s5 + $0xb8] sm:$0xff]
  %v462 = vld [vmem:[%s5 + $0xc0] sm:$0xff]
  %v463 = vld [vmem:[%s5 + $0xc8] sm:$0xff]
  %v464 = vld [vmem:[%s5 + $0xd0] sm:$0xff]
  %v465 = vld [vmem:[%s5 + $0xd8] sm:$0xff]
  %v466 = vld [vmem:[%s5 + $0xe0] sm:$0xff]
  %v467 = vld [vmem:[%s5 + $0xe8] sm:$0xff]
  %v468 = vld [vmem:[%s5 + $0xf0] sm:$0xff]
  %v469 = vld [vmem:[%s5 + $0xf8] sm:$0xff]
  %470 = vmatprep.subr.mxu0 0.0
  %471 = vmatpush1.msra.mxu0 %v453
  %472 = vmatprep.subr.mxu0 0.0
  %473 = vmatpush1.msra.mxu0 %v452
  %474 = vmatprep.subr.mxu0 0.0
  %475 = vmatpush1.msra.mxu0 %v451
  %476 = vmatprep.subr.mxu0 0.0
  %477 = vmatpush1.msra.mxu0 %v450
  %478 = vmatprep.subr.mxu0 0.0
  %479 = vmatpush1.msra.mxu0 %v449
  %480 = vmatprep.subr.mxu0 0.0
  %481 = vmatpush1.msra.mxu0 %v448
  %482 = vmatprep.subr.mxu0 0.0
  %483 = vmatpush1.msra.mxu0 %v447
  %484 = vmatprep.subr.mxu0 0.0
  %485 = vmatpush1.msra.mxu0 %v446
  %486 = vmatprep.subr.mxu0 0.0
  %487 = vmatpush1.msra.mxu0 %v445
  %488 = vmatprep.subr.mxu0 0.0
  %489 = vmatpush1.msra.mxu0 %v444
  %490 = vmatprep.subr.mxu0 0.0
  %491 = vmatpush1.msra.mxu0 %v443
  %492 = vmatprep.subr.mxu0 0.0
  %493 = vmatpush1.msra.mxu0 %v442
  %494 = vmatprep.subr.mxu0 0.0
  %495 = vmatpush1.msra.mxu0 %v441
  %496 = vmatprep.subr.mxu0 0.0
  %497 = vmatpush1.msra.mxu0 %v440
  %498 = vmatprep.subr.mxu0 0.0
  %499 = vmatpush1.msra.mxu0 %v439
  %500 = vmatprep.subr.mxu0 0.0
  %501 = vmatpush1.msra.mxu0 %v438
  %502 = vmatprep.subr.mxu0 0.0
  %503 = vmatpush2.msra.mxu0 %v469
  %504 = vmatprep.subr.mxu0 0.0
  %505 = vmatpush2.msra.mxu0 %v468
  %506 = vmatprep.subr.mxu0 0.0
  %507 = vmatpush2.msra.mxu0 %v467
  %508 = vmatprep.subr.mxu0 0.0
  %509 = vmatpush2.msra.mxu0 %v466
  %510 = vmatprep.subr.mxu0 0.0
  %511 = vmatpush2.msra.mxu0 %v465
  %512 = vmatprep.subr.mxu0 0.0
  %513 = vmatpush2.msra.mxu0 %v464
  %514 = vmatprep.subr.mxu0 0.0
  %515 = vmatpush2.msra.mxu0 %v463
  %516 = vmatprep.subr.mxu0 0.0
  %517 = vmatpush2.msra.mxu0 %v462
  %518 = vmatprep.subr.mxu0 0.0
  %519 = vmatpush2.msra.mxu0 %v461
  %520 = vmatprep.subr.mxu0 0.0
  %521 = vmatpush2.msra.mxu0 %v460
  %522 = vmatprep.subr.mxu0 0.0
  %523 = vmatpush2.msra.mxu0 %v459
  %524 = vmatprep.subr.mxu0 0.0
  %525 = vmatpush2.msra.mxu0 %v458
  %526 = vmatprep.subr.mxu0 0.0
  %527 = vmatpush2.msra.mxu0 %v457
  %528 = vmatprep.subr.mxu0 0.0
  %529 = vmatpush2.msra.mxu0 %v456
  %530 = vmatprep.subr.mxu0 0.0
  %531 = vmatpush2.msra.mxu0 %v455
  %532 = vmatprep.subr.mxu0 0.0
  %533 = vmatpush2.msra.mxu0 %v454
  %534 = vmatprep.mubr.f32.mxu0 %v437
  %535 = vmatmul.mubr.f32.gmra.mxu0 %v436
  %v536 = vpop.f32.mrf.mxu0
  %v537 = vadd.f32 0.0, %v536
  %v538 = vpop.f32.mrf.mxu0
  %539 = vdwg.mxu0
  %v540 = vmul.f32 %v537, 0.001953125
  %v541 = vmul.f32 %v540, %v540
  %v543 = vrot.slane %v541, 7
  %v545 = vsub.f32 %v540, %v543
  %v546 = vmax.f32 %v545, 0.0
  %v547 = vadd.f32 %v546, 1e-05
  %v548 = vrsqrt.pop %v547
  %v550 = vrot.slane %v548, 1
  %v553 = vrot.slane %v540, 7
  %v555 = vsel %vm435, %v550, %v553
  %v556 = vld [vmem:[%s6] sm:$0xff]
  %v557 = vld [vmem:[%s6 + $0x8] sm:$0xff]
  %vm558 = vcmask 64512
  %v560 = vsel %vm558, %v555, 0
  %562 = vmatprep.subr.mxu0 0.0
  %563 = vmatpush1.msra.mxu0 0.0
  %564 = vmatprep.subr.mxu0 0.0
  %565 = vmatpush1.msra.mxu0 0.0
  %566 = vmatprep.subr.mxu0 0.0
  %567 = vmatpush1.msra.mxu0 0.0
  %568 = vmatprep.subr.mxu0 0.0
  %569 = vmatpush1.msra.mxu0 0.0
  %570 = vmatprep.subr.mxu0 0.0
  %571 = vmatpush1.msra.mxu0 0.0
  %572 = vmatprep.subr.mxu0 0.0
  %573 = vmatpush1.msra.mxu0 0.0
  %574 = vmatprep.subr.mxu0 0.0
  %575 = vmatpush1.msra.mxu0 0.0
  %576 = vmatprep.subr.mxu0 0.0
  %577 = vmatpush1.msra.mxu0 0.0
  %578 = vmatprep.subr.mxu0 0.0
  %579 = vmatpush1.msra.mxu0 0.0
  %580 = vmatprep.subr.mxu0 0.0
  %581 = vmatpush1.msra.mxu0 0.0
  %582 = vmatprep.subr.mxu0 0.0
  %583 = vmatpush1.msra.mxu0 0.0
  %584 = vmatprep.subr.mxu0 0.0
  %585 = vmatpush1.msra.mxu0 0.0
  %586 = vmatprep.subr.mxu0 0.0
  %587 = vmatpush1.msra.mxu0 0.0
  %588 = vmatprep.subr.mxu0 0.0
  %589 = vmatpush1.msra.mxu0 0.0
  %590 = vmatprep.subr.mxu0 0.0
  %591 = vmatpush1.msra.mxu0 0.0
  %592 = vmatprep.subr.mxu0 %v557
  %593 = vmatpush1.msra.mxu0 %v556
  %594 = vmatprep.subr.mxu0 0.0
  %595 = vmatpush2.msra.mxu0 0.0
  %596 = vmatprep.subr.mxu0 0.0
  %597 = vmatpush2.msra.mxu0 0.0
  %598 = vmatprep.subr.mxu0 0.0
  %599 = vmatpush2.msra.mxu0 0.0
  %600 = vmatprep.subr.mxu0 0.0
  %601 = vmatpush2.msra.mxu0 0.0
  %602 = vmatprep.subr.mxu0 0.0
  %603 = vmatpush2.msra.mxu0 0.0
  %604 = vmatprep.subr.mxu0 0.0
  %605 = vmatpush2.msra.mxu0 0.0
  %606 = vmatprep.subr.mxu0 0.0
  %607 = vmatpush2.msra.mxu0 0.0
  %608 = vmatprep.subr.mxu0 0.0
  %609 = vmatpush2.msra.mxu0 0.0
  %610 = vmatprep.subr.mxu0 0.0
  %611 = vmatpush2.msra.mxu0 0.0
  %612 = vmatprep.subr.mxu0 0.0
  %613 = vmatpush2.msra.mxu0 0.0
  %614 = vmatprep.subr.mxu0 0.0
  %615 = vmatpush2.msra.mxu0 0.0
  %616 = vmatprep.subr.mxu0 0.0
  %617 = vmatpush2.msra.mxu0 0.0
  %618 = vmatprep.subr.mxu0 0.0
  %619 = vmatpush2.msra.mxu0 0.0
  %620 = vmatprep.subr.mxu0 0.0
  %621 = vmatpush2.msra.mxu0 0.0
  %622 = vmatprep.subr.mxu0 0.0
  %623 = vmatpush2.msra.mxu0 0.0
  %624 = vmatprep.subr.mxu0 0.0
  %625 = vmatpush2.msra.mxu0 0.0
  %626 = vmatprep.mubr.f32.mxu0 0.0
  %627 = vmatmul.mubr.f32.gmra.mxu0 %v560
  %v628 = vpop.f32.mrf.mxu0
  %v629 = vadd.f32 0.0, %v628
  %v630 = vpop.f32.mrf.mxu0
  %v631 = vadd.f32 0.0, %v630
  %632 = vdwg.mxu0
  %v633 = vld [vmem:[%s3] sm:$0x3]
  %v635 = vlaneseq
  %v636 = vshrl.u32 %v635, 7
  %v637 = vsub.s32 0, %v636
  %v638 = vrot.slane %v633, %v637
  %v639 = vlaneseq
  %v640 = vshrl.u32 %v639, 7
  %v641 = vsub.s32 1, %v640
  %v642 = vrot.slane %v633, %v641
  %v645 = vmul.f32 %v629, %v638
  %v646 = vmul.f32 %v631, %v642
  %v647 = vld [vmem:[%s4] sm:$0x3]
  %v650 = vrot.slane %v645, 7
  %v651 = vrot.slane %v646, 7
  %v654 = vmul.f32 %v629, %v650
  %v655 = vmul.f32 %v631, %v651
  %v658 = vcombine.low %v654, %v655
  %v660 = vunpack.c.l.s4 1966171168
  %v661 = vunpack.c.0.s8 %v660
  %v662 = vlaneseq
  %v663 = vshrl.u32 %v662, 7
  %v664 = vsub.s32 %v661, %v663
  %v665 = vrot.slane %v658, %v664
  %v666 = vcombine.high %v665, %v665
  %v668 = vunpack.c.l.s4 1966171168
  %v669 = vunpack.c.0.s8 %v668
  %v670 = vlaneseq
  %v671 = vshrl.u32 %v670, 7
  %v672 = vsub.s32 %v669, %v671
  %v673 = vrot.slane %v666, %v672
  %v675 = vsub.f32 %v647, %v673
  %v676 = vlaneseq
  %vm677 = vcmp.ge.s32.totalorder %v676, 0
  %vm678 = vcmp.lt.s32.totalorder %v676, 256
  %vm679 = vmand %vm677, %vm678
  %680 = vst.msk [vmem:[#allocation2] ss:$8 sm:$0x3] %vm679, 0.0
  %681 = vst.msk [vmem:[#allocation2] ss:$8 sm:$0x0] %vm679, 0.0
  %s682 = scalar_lea.vmem [#allocation2], 33
  %683 = vst.msk [vmem:[%s682] ss:$8 sm:$0x3] %vm679, 0.0
  %684 = vst.msk [vmem:[%s682] ss:$8 sm:$0x0] %vm679, 0.0
  %v685 = vlaneseq
  %v686 = vshrl.u32 %v685, 7
  %v687 = vsub.s32 0, %v686
  %v688 = vrot.slane %v645, %v687
  %v689 = vlaneseq
  %v690 = vshrl.u32 %v689, 7
  %v691 = vsub.s32 0, %v690
  %v692 = vrot.slane %v646, %v691
  %v693 = vmul.f32 %v399, %v688
  %v694 = vmul.f32 %v400, %v692
  %v695 = vmul.f32 %v401, %v688
  %v696 = vmul.f32 %v402, %v692
  %v698 = vlaneseq
  %v699 = vshrl.u32 %v698, 7
  %v700 = vsub.s32 0, %v699
  %v701 = vrot.slane %v675, %v700
  %v702 = vlaneseq
  %v703 = vshrl.u32 %v702, 7
  %v704 = vsub.s32 1, %v703
  %v705 = vrot.slane %v675, %v704
  %v708 = vadd.f32 %v693, %v701
  %v709 = vadd.f32 %v694, %v705
  %v710 = vadd.f32 %v695, %v701
  %v711 = vadd.f32 %v696, %v705
  %v716 = vrot.slane %v708, 7
  %v717 = vrot.slane %v709, 7
  %v718 = vrot.slane %v710, 7
  %v719 = vsel %vm435, %v716, %v718
  %v720 = vrot.slane %v711, 7
  %v721 = vsel %vm435, %v717, %v720
  %728 = vst [vmem:[#allocation2] sm:$0xfe] %v716
  %729 = vst [vmem:[#allocation2 + $0x8] sm:$0xfe] %v717
  %730 = vst [vmem:[#allocation2 + $0x10] sm:$0xff] %v719
  %731 = vst [vmem:[#allocation2 + $0x18] sm:$0xff] %v721
  %732 = vst [vmem:[#allocation2 + $0x20] sm:$0x1] %v718
  %733 = vst [vmem:[#allocation2 + $0x28] sm:$0x1] %v720
  %v734 = vld [vmem:[#allocation2] sm:$0xff]
  %v735 = vld [vmem:[#allocation2 + $0x8] sm:$0xff]
  %v736 = vld [vmem:[#allocation2 + $0x10] sm:$0xff]
  %v737 = vld [vmem:[#allocation2 + $0x18] sm:$0xff]
  %v738 = vld [vmem:[%s7] sm:$0xff]
  %v739 = vld [vmem:[%s7 + $0x8] sm:$0xff]
  %v740 = vld [vmem:[%s7 + $0x10] sm:$0xff]
  %v741 = vld [vmem:[%s7 + $0x18] sm:$0xff]
  %v742 = vld [vmem:[%s7 + $0x20] sm:$0xff]
  %v743 = vld [vmem:[%s7 + $0x28] sm:$0xff]
  %v744 = vld [vmem:[%s7 + $0x30] sm:$0xff]
  %v745 = vld [vmem:[%s7 + $0x38] sm:$0xff]
  %v746 = vld [vmem:[%s7 + $0x40] sm:$0xff]
  %v747 = vld [vmem:[%s7 + $0x48] sm:$0xff]
  %v748 = vld [vmem:[%s7 + $0x50] sm:$0xff]
  %v749 = vld [vmem:[%s7 + $0x58] sm:$0xff]
  %v750 = vld [vmem:[%s7 + $0x60] sm:$0xff]
  %v751 = vld [vmem:[%s7 + $0x68] sm:$0xff]
  %v752 = vld [vmem:[%s7 + $0x70] sm:$0xff]
  %v753 = vld [vmem:[%s7 + $0x78] sm:$0xff]
  %v754 = vld [vmem:[%s7 + $0x80] sm:$0xff]
  %v755 = vld [vmem:[%s7 + $0x88] sm:$0xff]
  %v756 = vld [vmem:[%s7 + $0x90] sm:$0xff]
  %v757 = vld [vmem:[%s7 + $0x98] sm:$0xff]
  %v758 = vld [vmem:[%s7 + $0xa0] sm:$0xff]
  %v759 = vld [vmem:[%s7 + $0xa8] sm:$0xff]
  %v760 = vld [vmem:[%s7 + $0xb0] sm:$0xff]
  %v761 = vld [vmem:[%s7 + $0xb8] sm:$0xff]
  %v762 = vld [vmem:[%s7 + $0xc0] sm:$0xff]
  %v763 = vld [vmem:[%s7 + $0xc8] sm:$0xff]
  %v764 = vld [vmem:[%s7 + $0xd0] sm:$0xff]
  %v765 = vld [vmem:[%s7 + $0xd8] sm:$0xff]
  %v766 = vld [vmem:[%s7 + $0xe0] sm:$0xff]
  %v767 = vld [vmem:[%s7 + $0xe8] sm:$0xff]
  %v768 = vld [vmem:[%s7 + $0xf0] sm:$0xff]
  %v769 = vld [vmem:[%s7 + $0xf8] sm:$0xff]
  %v770 = vld [vmem:[%s7 + $0x100] sm:$0xff]
  %v771 = vld [vmem:[%s7 + $0x108] sm:$0xff]
  %v772 = vld [vmem:[%s7 + $0x110] sm:$0xff]
  %v773 = vld [vmem:[%s7 + $0x118] sm:$0xff]
  %v774 = vld [vmem:[%s7 + $0x120] sm:$0xff]
  %v775 = vld [vmem:[%s7 + $0x128] sm:$0xff]
  %v776 = vld [vmem:[%s7 + $0x130] sm:$0xff]
  %v777 = vld [vmem:[%s7 + $0x138] sm:$0xff]
  %v778 = vld [vmem:[%s7 + $0x140] sm:$0xff]
  %v779 = vld [vmem:[%s7 + $0x148] sm:$0xff]
  %v780 = vld [vmem:[%s7 + $0x150] sm:$0xff]
  %v781 = vld [vmem:[%s7 + $0x158] sm:$0xff]
  %v782 = vld [vmem:[%s7 + $0x160] sm:$0xff]
  %v783 = vld [vmem:[%s7 + $0x168] sm:$0xff]
  %v784 = vld [vmem:[%s7 + $0x170] sm:$0xff]
  %v785 = vld [vmem:[%s7 + $0x178] sm:$0xff]
  %v786 = vld [vmem:[%s7 + $0x180] sm:$0xff]
  %v787 = vld [vmem:[%s7 + $0x188] sm:$0xff]
  %v788 = vld [vmem:[%s7 + $0x190] sm:$0xff]
  %v789 = vld [vmem:[%s7 + $0x198] sm:$0xff]
  %v790 = vld [vmem:[%s7 + $0x1a0] sm:$0xff]
  %v791 = vld [vmem:[%s7 + $0x1a8] sm:$0xff]
  %v792 = vld [vmem:[%s7 + $0x1b0] sm:$0xff]
  %v793 = vld [vmem:[%s7 + $0x1b8] sm:$0xff]
  %v794 = vld [vmem:[%s7 + $0x1c0] sm:$0xff]
  %v795 = vld [vmem:[%s7 + $0x1c8] sm:$0xff]
  %v796 = vld [vmem:[%s7 + $0x1d0] sm:$0xff]
  %v797 = vld [vmem:[%s7 + $0x1d8] sm:$0xff]
  %v798 = vld [vmem:[%s7 + $0x1e0] sm:$0xff]
  %v799 = vld [vmem:[%s7 + $0x1e8] sm:$0xff]
  %v800 = vld [vmem:[%s7 + $0x1f0] sm:$0xff]
  %v801 = vld [vmem:[%s7 + $0x1f8] sm:$0xff]
  %v802 = vld [vmem:[#allocation2] sm:$0xfe]
  %v803 = vld [vmem:[#allocation2 + $0x8] sm:$0xfe]
  %v804 = vld [vmem:[#allocation2 + $0x20] sm:$0x1]
  %v805 = vld [vmem:[#allocation2 + $0x28] sm:$0x1]
  %s806 = scalar_lea.vmem %s7, 512
  %v807 = vld [vmem:[%s806] sm:$0xff]
  %v808 = vld [vmem:[%s806 + $0x8] sm:$0xff]
  %v809 = vld [vmem:[%s806 + $0x10] sm:$0xff]
  %v810 = vld [vmem:[%s806 + $0x18] sm:$0xff]
  %v811 = vld [vmem:[%s806 + $0x20] sm:$0xff]
  %v812 = vld [vmem:[%s806 + $0x28] sm:$0xff]
  %v813 = vld [vmem:[%s806 + $0x30] sm:$0xff]
  %v814 = vld [vmem:[%s806 + $0x38] sm:$0xff]
  %v815 = vld [vmem:[%s806 + $0x40] sm:$0xff]
  %v816 = vld [vmem:[%s806 + $0x48] sm:$0xff]
  %v817 = vld [vmem:[%s806 + $0x50] sm:$0xff]
  %v818 = vld [vmem:[%s806 + $0x58] sm:$0xff]
  %v819 = vld [vmem:[%s806 + $0x60] sm:$0xff]
  %v820 = vld [vmem:[%s806 + $0x68] sm:$0xff]
  %v821 = vld [vmem:[%s806 + $0x70] sm:$0xff]
  %v822 = vld [vmem:[%s806 + $0x78] sm:$0xff]
  %v823 = vld [vmem:[%s806 + $0x80] sm:$0xff]
  %v824 = vld [vmem:[%s806 + $0x88] sm:$0xff]
  %v825 = vld [vmem:[%s806 + $0x90] sm:$0xff]
  %v826 = vld [vmem:[%s806 + $0x98] sm:$0xff]
  %v827 = vld [vmem:[%s806 + $0xa0] sm:$0xff]
  %v828 = vld [vmem:[%s806 + $0xa8] sm:$0xff]
  %v829 = vld [vmem:[%s806 + $0xb0] sm:$0xff]
  %v830 = vld [vmem:[%s806 + $0xb8] sm:$0xff]
  %v831 = vld [vmem:[%s806 + $0xc0] sm:$0xff]
  %v832 = vld [vmem:[%s806 + $0xc8] sm:$0xff]
  %v833 = vld [vmem:[%s806 + $0xd0] sm:$0xff]
  %v834 = vld [vmem:[%s806 + $0xd8] sm:$0xff]
  %v835 = vld [vmem:[%s806 + $0xe0] sm:$0xff]
  %v836 = vld [vmem:[%s806 + $0xe8] sm:$0xff]
  %v837 = vld [vmem:[%s806 + $0xf0] sm:$0xff]
  %v838 = vld [vmem:[%s806 + $0xf8] sm:$0xff]
  %v839 = vld [vmem:[%s806 + $0x100] sm:$0xff]
  %v840 = vld [vmem:[%s806 + $0x108] sm:$0xff]
  %v841 = vld [vmem:[%s806 + $0x110] sm:$0xff]
  %v842 = vld [vmem:[%s806 + $0x118] sm:$0xff]
  %v843 = vld [vmem:[%s806 + $0x120] sm:$0xff]
  %v844 = vld [vmem:[%s806 + $0x128] sm:$0xff]
  %v845 = vld [vmem:[%s806 + $0x130] sm:$0xff]
  %v846 = vld [vmem:[%s806 + $0x138] sm:$0xff]
  %v847 = vld [vmem:[%s806 + $0x140] sm:$0xff]
  %v848 = vld [vmem:[%s806 + $0x148] sm:$0xff]
  %v849 = vld [vmem:[%s806 + $0x150] sm:$0xff]
  %v850 = vld [vmem:[%s806 + $0x158] sm:$0xff]
  %v851 = vld [vmem:[%s806 + $0x160] sm:$0xff]
  %v852 = vld [vmem:[%s806 + $0x168] sm:$0xff]
  %v853 = vld [vmem:[%s806 + $0x170] sm:$0xff]
  %v854 = vld [vmem:[%s806 + $0x178] sm:$0xff]
  %v855 = vld [vmem:[%s806 + $0x180] sm:$0xff]
  %v856 = vld [vmem:[%s806 + $0x188] sm:$0xff]
  %v857 = vld [vmem:[%s806 + $0x190] sm:$0xff]
  %v858 = vld [vmem:[%s806 + $0x198] sm:$0xff]
  %v859 = vld [vmem:[%s806 + $0x1a0] sm:$0xff]
  %v860 = vld [vmem:[%s806 + $0x1a8] sm:$0xff]
  %v861 = vld [vmem:[%s806 + $0x1b0] sm:$0xff]
  %v862 = vld [vmem:[%s806 + $0x1b8] sm:$0xff]
  %v863 = vld [vmem:[%s806 + $0x1c0] sm:$0xff]
  %v864 = vld [vmem:[%s806 + $0x1c8] sm:$0xff]
  %v865 = vld [vmem:[%s806 + $0x1d0] sm:$0xff]
  %v866 = vld [vmem:[%s806 + $0x1d8] sm:$0xff]
  %v867 = vld [vmem:[%s806 + $0x1e0] sm:$0xff]
  %v868 = vld [vmem:[%s806 + $0x1e8] sm:$0xff]
  %v869 = vld [vmem:[%s806 + $0x1f0] sm:$0xff]
  %v870 = vld [vmem:[%s806 + $0x1f8] sm:$0xff]
  %vm877 = vcmask 1046528
  %v878 = vrot.slane %v802, 1
  %v879 = vrot.slane %v736, 1
  %v880 = vsel %vm877, %v878, %v879
  %v881 = vrot.slane %v803, 1
  %v882 = vrot.slane %v737, 1
  %v883 = vsel %vm877, %v881, %v882
  %v884 = vrot.slane %v804, 1
  %v885 = vsel %vm877, %v879, %v884
  %v886 = vrot.slane %v805, 1
  %v887 = vsel %vm877, %v882, %v886
  %892 = vmatprep.subr.mxu0 %v838
  %893 = vmatpush1.msra.mxu0 %v837
  %894 = vmatprep.subr.mxu0 %v836
  %895 = vmatpush1.msra.mxu0 %v835
  %896 = vmatprep.subr.mxu0 %v834
  %897 = vmatpush1.msra.mxu0 %v833
  %898 = vmatprep.subr.mxu0 %v832
  %899 = vmatpush1.msra.mxu0 %v831
  %900 = vmatprep.subr.mxu0 %v830
  %901 = vmatpush1.msra.mxu0 %v829
  %902 = vmatprep.subr.mxu0 %v828
  %903 = vmatpush1.msra.mxu0 %v827
  %904 = vmatprep.subr.mxu0 %v826
  %905 = vmatpush1.msra.mxu0 %v825
  %906 = vmatprep.subr.mxu0 %v824
  %907 = vmatpush1.msra.mxu0 %v823
  %908 = vmatprep.subr.mxu0 %v822
  %909 = vmatpush1.msra.mxu0 %v821
  %910 = vmatprep.subr.mxu0 %v820
  %911 = vmatpush1.msra.mxu0 %v819
  %912 = vmatprep.subr.mxu0 %v818
  %913 = vmatpush1.msra.mxu0 %v817
  %914 = vmatprep.subr.mxu0 %v816
  %915 = vmatpush1.msra.mxu0 %v815
  %916 = vmatprep.subr.mxu0 %v814
  %917 = vmatpush1.msra.mxu0 %v813
  %918 = vmatprep.subr.mxu0 %v812
  %919 = vmatpush1.msra.mxu0 %v811
  %920 = vmatprep.subr.mxu0 %v810
  %921 = vmatpush1.msra.mxu0 %v809
  %922 = vmatprep.subr.mxu0 %v808
  %923 = vmatpush1.msra.mxu0 %v807
  %924 = vmatprep.subr.mxu0 %v870
  %925 = vmatpush2.msra.mxu0 %v869
  %926 = vmatprep.subr.mxu0 %v868
  %927 = vmatpush2.msra.mxu0 %v867
  %928 = vmatprep.subr.mxu0 %v866
  %929 = vmatpush2.msra.mxu0 %v865
  %930 = vmatprep.subr.mxu0 %v864
  %931 = vmatpush2.msra.mxu0 %v863
  %932 = vmatprep.subr.mxu0 %v862
  %933 = vmatpush2.msra.mxu0 %v861
  %934 = vmatprep.subr.mxu0 %v860
  %935 = vmatpush2.msra.mxu0 %v859
  %936 = vmatprep.subr.mxu0 %v858
  %937 = vmatpush2.msra.mxu0 %v857
  %938 = vmatprep.subr.mxu0 %v856
  %939 = vmatpush2.msra.mxu0 %v855
  %940 = vmatprep.subr.mxu0 %v854
  %941 = vmatpush2.msra.mxu0 %v853
  %942 = vmatprep.subr.mxu0 %v852
  %943 = vmatpush2.msra.mxu0 %v851
  %944 = vmatprep.subr.mxu0 %v850
  %945 = vmatpush2.msra.mxu0 %v849
  %946 = vmatprep.subr.mxu0 %v848
  %947 = vmatpush2.msra.mxu0 %v847
  %948 = vmatprep.subr.mxu0 %v846
  %949 = vmatpush2.msra.mxu0 %v845
  %950 = vmatprep.subr.mxu0 %v844
  %951 = vmatpush2.msra.mxu0 %v843
  %952 = vmatprep.subr.mxu0 %v842
  %953 = vmatpush2.msra.mxu0 %v841
  %954 = vmatprep.subr.mxu0 %v840
  %955 = vmatpush2.msra.mxu0 %v839
  %956 = vmatprep.mubr.f32.mxu0 %v883
  %957 = vmatmul.mubr.f32.gmra.mxu0 %v880
  %v958 = vpop.f32.mrf.mxu0
  %v959 = vadd.f32 0.0, %v958
  %v960 = vpop.f32.mrf.mxu0
  %v961 = vadd.f32 0.0, %v960
  %962 = vmatprep.mubr.f32.mxu0 %v887
  %963 = vmatmul.mubr.f32.gmra.mxu0 %v885
  %v964 = vpop.f32.mrf.mxu0
  %v965 = vadd.f32 0.0, %v964
  %v966 = vpop.f32.mrf.mxu0
  %v967 = vadd.f32 0.0, %v966
  %968 = vdwg.mxu0
  %969 = vmatprep.subr.mxu0 %v769
  %970 = vmatpush1.msra.mxu0 %v768
  %971 = vmatprep.subr.mxu0 %v767
  %972 = vmatpush1.msra.mxu0 %v766
  %973 = vmatprep.subr.mxu0 %v765
  %974 = vmatpush1.msra.mxu0 %v764
  %975 = vmatprep.subr.mxu0 %v763
  %976 = vmatpush1.msra.mxu0 %v762
  %977 = vmatprep.subr.mxu0 %v761
  %978 = vmatpush1.msra.mxu0 %v760
  %979 = vmatprep.subr.mxu0 %v759
  %980 = vmatpush1.msra.mxu0 %v758
  %981 = vmatprep.subr.mxu0 %v757
  %982 = vmatpush1.msra.mxu0 %v756
  %983 = vmatprep.subr.mxu0 %v755
  %984 = vmatpush1.msra.mxu0 %v754
  %985 = vmatprep.subr.mxu0 %v753
  %986 = vmatpush1.msra.mxu0 %v752
  %987 = vmatprep.subr.mxu0 %v751
  %988 = vmatpush1.msra.mxu0 %v750
  %989 = vmatprep.subr.mxu0 %v749
  %990 = vmatpush1.msra.mxu0 %v748
  %991 = vmatprep.subr.mxu0 %v747
  %992 = vmatpush1.msra.mxu0 %v746
  %993 = vmatprep.subr.mxu0 %v745
  %994 = vmatpush1.msra.mxu0 %v744
  %995 = vmatprep.subr.mxu0 %v743
  %996 = vmatpush1.msra.mxu0 %v742
  %997 = vmatprep.subr.mxu0 %v741
  %998 = vmatpush1.msra.mxu0 %v740
  %999 = vmatprep.subr.mxu0 %v739
  %1000 = vmatpush1.msra.mxu0 %v738
  %1001 = vmatprep.subr.mxu0 %v801
  %1002 = vmatpush2.msra.mxu0 %v800
  %1003 = vmatprep.subr.mxu0 %v799
  %1004 = vmatpush2.msra.mxu0 %v798
  %1005 = vmatprep.subr.mxu0 %v797
  %1006 = vmatpush2.msra.mxu0 %v796
  %1007 = vmatprep.subr.mxu0 %v795
  %1008 = vmatpush2.msra.mxu0 %v794
  %1009 = vmatprep.subr.mxu0 %v793
  %1010 = vmatpush2.msra.mxu0 %v792
  %1011 = vmatprep.subr.mxu0 %v791
  %1012 = vmatpush2.msra.mxu0 %v790
  %1013 = vmatprep.subr.mxu0 %v789
  %1014 = vmatpush2.msra.mxu0 %v788
  %1015 = vmatprep.subr.mxu0 %v787
  %1016 = vmatpush2.msra.mxu0 %v786
  %1017 = vmatprep.subr.mxu0 %v785
  %1018 = vmatpush2.msra.mxu0 %v784
  %1019 = vmatprep.subr.mxu0 %v783
  %1020 = vmatpush2.msra.mxu0 %v782
  %1021 = vmatprep.subr.mxu0 %v781
  %1022 = vmatpush2.msra.mxu0 %v780
  %1023 = vmatprep.subr.mxu0 %v779
  %1024 = vmatpush2.msra.mxu0 %v778
  %1025 = vmatprep.subr.mxu0 %v777
  %1026 = vmatpush2.msra.mxu0 %v776
  %1027 = vmatprep.subr.mxu0 %v775
  %1028 = vmatpush2.msra.mxu0 %v774
  %1029 = vmatprep.subr.mxu0 %v773
  %1030 = vmatpush2.msra.mxu0 %v772
  %1031 = vmatprep.subr.mxu0 %v771
  %1032 = vmatpush2.msra.mxu0 %v770
  %1033 = vmatprep.mubr.f32.mxu0 %v735
  %1034 = vmatmul.mubr.f32.gmra.mxu0 %v734
  %v1035 = vpop.f32.mrf.mxu0
  %v1036 = vadd.f32 %v959, %v1035
  %v1037 = vpop.f32.mrf.mxu0
  %v1038 = vadd.f32 %v961, %v1037
  %1039 = vmatprep.mubr.f32.mxu0 %v737
  %1040 = vmatmul.mubr.f32.gmra.mxu0 %v736
  %v1041 = vpop.f32.mrf.mxu0
  %v1042 = vadd.f32 %v965, %v1041
  %v1043 = vpop.f32.mrf.mxu0
  %v1044 = vadd.f32 %v967, %v1043
  %1045 = vdwg.mxu0
  %v1046 = vld [vmem:[#allocation2] sm:$0xfc]
  %v1047 = vld [vmem:[#allocation2 + $0x8] sm:$0xfc]
  %v1048 = vld [vmem:[#allocation2 + $0x20] sm:$0x3]
  %v1049 = vld [vmem:[#allocation2 + $0x28] sm:$0x3]
  %s1050 = scalar_lea.vmem %s7, 1024
  %v1051 = vld [vmem:[%s1050] sm:$0xff]
  %v1052 = vld [vmem:[%s1050 + $0x8] sm:$0xff]
  %v1053 = vld [vmem:[%s1050 + $0x10] sm:$0xff]
  %v1054 = vld [vmem:[%s1050 + $0x18] sm:$0xff]
  %v1055 = vld [vmem:[%s1050 + $0x20] sm:$0xff]
  %v1056 = vld [vmem:[%s1050 + $0x28] sm:$0xff]
  %v1057 = vld [vmem:[%s1050 + $0x30] sm:$0xff]
  %v1058 = vld [vmem:[%s1050 + $0x38] sm:$0xff]
  %v1059 = vld [vmem:[%s1050 + $0x40] sm:$0xff]
  %v1060 = vld [vmem:[%s1050 + $0x48] sm:$0xff]
  %v1061 = vld [vmem:[%s1050 + $0x50] sm:$0xff]
  %v1062 = vld [vmem:[%s1050 + $0x58] sm:$0xff]
  %v1063 = vld [vmem:[%s1050 + $0x60] sm:$0xff]
  %v1064 = vld [vmem:[%s1050 + $0x68] sm:$0xff]
  %v1065 = vld [vmem:[%s1050 + $0x70] sm:$0xff]
  %v1066 = vld [vmem:[%s1050 + $0x78] sm:$0xff]
  %v1067 = vld [vmem:[%s1050 + $0x80] sm:$0xff]
  %v1068 = vld [vmem:[%s1050 + $0x88] sm:$0xff]
  %v1069 = vld [vmem:[%s1050 + $0x90] sm:$0xff]
  %v1070 = vld [vmem:[%s1050 + $0x98] sm:$0xff]
  %v1071 = vld [vmem:[%s1050 + $0xa0] sm:$0xff]
  %v1072 = vld [vmem:[%s1050 + $0xa8] sm:$0xff]
  %v1073 = vld [vmem:[%s1050 + $0xb0] sm:$0xff]
  %v1074 = vld [vmem:[%s1050 + $0xb8] sm:$0xff]
  %v1075 = vld [vmem:[%s1050 + $0xc0] sm:$0xff]
  %v1076 = vld [vmem:[%s1050 + $0xc8] sm:$0xff]
  %v1077 = vld [vmem:[%s1050 + $0xd0] sm:$0xff]
  %v1078 = vld [vmem:[%s1050 + $0xd8] sm:$0xff]
  %v1079 = vld [vmem:[%s1050 + $0xe0] sm:$0xff]
  %v1080 = vld [vmem:[%s1050 + $0xe8] sm:$0xff]
  %v1081 = vld [vmem:[%s1050 + $0xf0] sm:$0xff]
  %v1082 = vld [vmem:[%s1050 + $0xf8] sm:$0xff]
  %v1083 = vld [vmem:[%s1050 + $0x100] sm:$0xff]
  %v1084 = vld [vmem:[%s1050 + $0x108] sm:$0xff]
  %v1085 = vld [vmem:[%s1050 + $0x110] sm:$0xff]
  %v1086 = vld [vmem:[%s1050 + $0x118] sm:$0xff]
  %v1087 = vld [vmem:[%s1050 + $0x120] sm:$0xff]
  %v1088 = vld [vmem:[%s1050 + $0x128] sm:$0xff]
  %v1089 = vld [vmem:[%s1050 + $0x130] sm:$0xff]
  %v1090 = vld [vmem:[%s1050 + $0x138] sm:$0xff]
  %v1091 = vld [vmem:[%s1050 + $0x140] sm:$0xff]
  %v1092 = vld [vmem:[%s1050 + $0x148] sm:$0xff]
  %v1093 = vld [vmem:[%s1050 + $0x150] sm:$0xff]
  %v1094 = vld [vmem:[%s1050 + $0x158] sm:$0xff]
  %v1095 = vld [vmem:[%s1050 + $0x160] sm:$0xff]
  %v1096 = vld [vmem:[%s1050 + $0x168] sm:$0xff]
  %v1097 = vld [vmem:[%s1050 + $0x170] sm:$0xff]
  %v1098 = vld [vmem:[%s1050 + $0x178] sm:$0xff]
  %v1099 = vld [vmem:[%s1050 + $0x180] sm:$0xff]
  %v1100 = vld [vmem:[%s1050 + $0x188] sm:$0xff]
  %v1101 = vld [vmem:[%s1050 + $0x190] sm:$0xff]
  %v1102 = vld [vmem:[%s1050 + $0x198] sm:$0xff]
  %v1103 = vld [vmem:[%s1050 + $0x1a0] sm:$0xff]
  %v1104 = vld [vmem:[%s1050 + $0x1a8] sm:$0xff]
  %v1105 = vld [vmem:[%s1050 + $0x1b0] sm:$0xff]
  %v1106 = vld [vmem:[%s1050 + $0x1b8] sm:$0xff]
  %v1107 = vld [vmem:[%s1050 + $0x1c0] sm:$0xff]
  %v1108 = vld [vmem:[%s1050 + $0x1c8] sm:$0xff]
  %v1109 = vld [vmem:[%s1050 + $0x1d0] sm:$0xff]
  %v1110 = vld [vmem:[%s1050 + $0x1d8] sm:$0xff]
  %v1111 = vld [vmem:[%s1050 + $0x1e0] sm:$0xff]
  %v1112 = vld [vmem:[%s1050 + $0x1e8] sm:$0xff]
  %v1113 = vld [vmem:[%s1050 + $0x1f0] sm:$0xff]
  %v1114 = vld [vmem:[%s1050 + $0x1f8] sm:$0xff]
  %vm1119 = vcmask 1045504
  %v1120 = vrot.slane %v1046, 2
  %v1121 = vrot.slane %v736, 2
  %v1122 = vsel %vm1119, %v1120, %v1121
  %v1123 = vrot.slane %v1047, 2
  %v1124 = vrot.slane %v737, 2
  %v1125 = vsel %vm1119, %v1123, %v1124
  %v1126 = vrot.slane %v1048, 2
  %v1127 = vsel %vm1119, %v1121, %v1126
  %v1128 = vrot.slane %v1049, 2
  %v1129 = vsel %vm1119, %v1124, %v1128
  %1134 = vmatprep.subr.mxu0 %v1082
  %1135 = vmatpush1.msra.mxu0 %v1081
  %1136 = vmatprep.subr.mxu0 %v1080
  %1137 = vmatpush1.msra.mxu0 %v1079
  %1138 = vmatprep.subr.mxu0 %v1078
  %1139 = vmatpush1.msra.mxu0 %v1077
  %1140 = vmatprep.subr.mxu0 %v1076
  %1141 = vmatpush1.msra.mxu0 %v1075
  %1142 = vmatprep.subr.mxu0 %v1074
  %1143 = vmatpush1.msra.mxu0 %v1073
  %1144 = vmatprep.subr.mxu0 %v1072
  %1145 = vmatpush1.msra.mxu0 %v1071
  %1146 = vmatprep.subr.mxu0 %v1070
  %1147 = vmatpush1.msra.mxu0 %v1069
  %1148 = vmatprep.subr.mxu0 %v1068
  %1149 = vmatpush1.msra.mxu0 %v1067
  %1150 = vmatprep.subr.mxu0 %v1066
  %1151 = vmatpush1.msra.mxu0 %v1065
  %1152 = vmatprep.subr.mxu0 %v1064
  %1153 = vmatpush1.msra.mxu0 %v1063
  %1154 = vmatprep.subr.mxu0 %v1062
  %1155 = vmatpush1.msra.mxu0 %v1061
  %1156 = vmatprep.subr.mxu0 %v1060
  %1157 = vmatpush1.msra.mxu0 %v1059
  %1158 = vmatprep.subr.mxu0 %v1058
  %1159 = vmatpush1.msra.mxu0 %v1057
  %1160 = vmatprep.subr.mxu0 %v1056
  %1161 = vmatpush1.msra.mxu0 %v1055
  %1162 = vmatprep.subr.mxu0 %v1054
  %1163 = vmatpush1.msra.mxu0 %v1053
  %1164 = vmatprep.subr.mxu0 %v1052
  %1165 = vmatpush1.msra.mxu0 %v1051
  %1166 = vmatprep.subr.mxu0 %v1114
  %1167 = vmatpush2.msra.mxu0 %v1113
  %1168 = vmatprep.subr.mxu0 %v1112
  %1169 = vmatpush2.msra.mxu0 %v1111
  %1170 = vmatprep.subr.mxu0 %v1110
  %1171 = vmatpush2.msra.mxu0 %v1109
  %1172 = vmatprep.subr.mxu0 %v1108
  %1173 = vmatpush2.msra.mxu0 %v1107
  %1174 = vmatprep.subr.mxu0 %v1106
  %1175 = vmatpush2.msra.mxu0 %v1105
  %1176 = vmatprep.subr.mxu0 %v1104
  %1177 = vmatpush2.msra.mxu0 %v1103
  %1178 = vmatprep.subr.mxu0 %v1102
  %1179 = vmatpush2.msra.mxu0 %v1101
  %1180 = vmatprep.subr.mxu0 %v1100
  %1181 = vmatpush2.msra.mxu0 %v1099
  %1182 = vmatprep.subr.mxu0 %v1098
  %1183 = vmatpush2.msra.mxu0 %v1097
  %1184 = vmatprep.subr.mxu0 %v1096
  %1185 = vmatpush2.msra.mxu0 %v1095
  %1186 = vmatprep.subr.mxu0 %v1094
  %1187 = vmatpush2.msra.mxu0 %v1093
  %1188 = vmatprep.subr.mxu0 %v1092
  %1189 = vmatpush2.msra.mxu0 %v1091
  %1190 = vmatprep.subr.mxu0 %v1090
  %1191 = vmatpush2.msra.mxu0 %v1089
  %1192 = vmatprep.subr.mxu0 %v1088
  %1193 = vmatpush2.msra.mxu0 %v1087
  %1194 = vmatprep.subr.mxu0 %v1086
  %1195 = vmatpush2.msra.mxu0 %v1085
  %1196 = vmatprep.subr.mxu0 %v1084
  %1197 = vmatpush2.msra.mxu0 %v1083
  %1198 = vmatprep.mubr.f32.mxu0 %v1125
  %1199 = vmatmul.mubr.f32.gmra.mxu0 %v1122
  %v1200 = vpop.f32.mrf.mxu0
  %v1201 = vadd.f32 0.0, %v1200
  %v1202 = vpop.f32.mrf.mxu0
  %v1203 = vadd.f32 0.0, %v1202
  %1204 = vmatprep.mubr.f32.mxu0 %v1129
  %1205 = vmatmul.mubr.f32.gmra.mxu0 %v1127
  %v1206 = vpop.f32.mrf.mxu0
  %v1207 = vadd.f32 0.0, %v1206
  %v1208 = vpop.f32.mrf.mxu0
  %v1209 = vadd.f32 0.0, %v1208
  %1210 = vdwg.mxu0
  %v1211 = vadd.f32 %v1036, %v1201
  %v1212 = vadd.f32 %v1038, %v1203
  %v1213 = vadd.f32 %v1042, %v1207
  %v1214 = vadd.f32 %v1044, %v1209
  %v1215 = vld [vmem:[%s8] sm:$0x3]
  %v1217 = vlaneseq
  %v1218 = vshrl.u32 %v1217, 7
  %v1219 = vsub.s32 0, %v1218
  %v1220 = vrot.slane %v1215, %v1219
  %v1221 = vlaneseq
  %v1222 = vshrl.u32 %v1221, 7
  %v1223 = vsub.s32 1, %v1222
  %v1224 = vrot.slane %v1215, %v1223
  %v1227 = vadd.f32 %v1211, %v1220
  %v1228 = vadd.f32 %v1212, %v1224
  %v1229 = vadd.f32 %v1213, %v1220
  %v1230 = vadd.f32 %v1214, %v1224
  %v1231 = vmax.f32 %v1227, 0.0
  %v1232 = vmax.f32 %v1228, 0.0
  %v1233 = vmax.f32 %v1229, 0.0
  %v1234 = vmax.f32 %v1230, 0.0
  %v1235 = vadd.f32 %v1231, %v1233
  %v1236 = vrot.slane %v1235, 4
  %v1237 = vadd.f32 %v1235, %v1236
  %v1238 = vrot.slane %v1237, 2
  %v1239 = vadd.f32 %v1237, %v1238
  %v1240 = vrot.slane %v1239, 1
  %v1241 = vadd.f32 %v1239, %v1240
  %v1242 = vadd.f32 %v1232, %v1234
  %v1243 = vrot.slane %v1242, 4
  %v1244 = vadd.f32 %v1242, %v1243
  %v1245 = vrot.slane %v1244, 2
  %v1246 = vadd.f32 %v1244, %v1245
  %v1247 = vrot.slane %v1246, 1
  %v1248 = vadd.f32 %v1246, %v1247
  %v1249 = vmul.f32 %v1231, %v1231
  %v1250 = vmul.f32 %v1232, %v1232
  %v1251 = vmul.f32 %v1233, %v1233
  %v1252 = vmul.f32 %v1234, %v1234
  %v1253 = vadd.f32 %v1249, %v1251
  %v1254 = vrot.slane %v1253, 4
  %v1255 = vadd.f32 %v1253, %v1254
  %v1256 = vrot.slane %v1255, 2
  %v1257 = vadd.f32 %v1255, %v1256
  %v1258 = vrot.slane %v1257, 1
  %v1259 = vadd.f32 %v1257, %v1258
  %v1260 = vadd.f32 %v1250, %v1252
  %v1261 = vrot.slane %v1260, 4
  %v1262 = vadd.f32 %v1260, %v1261
  %v1263 = vrot.slane %v1262, 2
  %v1264 = vadd.f32 %v1262, %v1263
  %v1265 = vrot.slane %v1264, 1
  %v1266 = vadd.f32 %v1264, %v1265
  %v1267 = vsel %vm435, %v1241, %v1259
  %v1268 = vsel %vm435, %v1248, %v1266
  %v1269 = vld [vmem:[%s11] sm:$0xff]
  %v1270 = vld [vmem:[%s11 + $0x8] sm:$0xff]
  %v1271 = vld [vmem:[%s11 + $0x10] sm:$0xff]
  %v1272 = vld [vmem:[%s11 + $0x18] sm:$0xff]
  %v1273 = vld [vmem:[%s11 + $0x20] sm:$0xff]
  %v1274 = vld [vmem:[%s11 + $0x28] sm:$0xff]
  %v1275 = vld [vmem:[%s11 + $0x30] sm:$0xff]
  %v1276 = vld [vmem:[%s11 + $0x38] sm:$0xff]
  %v1277 = vld [vmem:[%s11 + $0x40] sm:$0xff]
  %v1278 = vld [vmem:[%s11 + $0x48] sm:$0xff]
  %v1279 = vld [vmem:[%s11 + $0x50] sm:$0xff]
  %v1280 = vld [vmem:[%s11 + $0x58] sm:$0xff]
  %v1281 = vld [vmem:[%s11 + $0x60] sm:$0xff]
  %v1282 = vld [vmem:[%s11 + $0x68] sm:$0xff]
  %v1283 = vld [vmem:[%s11 + $0x70] sm:$0xff]
  %v1284 = vld [vmem:[%s11 + $0x78] sm:$0xff]
  %v1285 = vld [vmem:[%s11 + $0x80] sm:$0xff]
  %v1286 = vld [vmem:[%s11 + $0x88] sm:$0xff]
  %v1287 = vld [vmem:[%s11 + $0x90] sm:$0xff]
  %v1288 = vld [vmem:[%s11 + $0x98] sm:$0xff]
  %v1289 = vld [vmem:[%s11 + $0xa0] sm:$0xff]
  %v1290 = vld [vmem:[%s11 + $0xa8] sm:$0xff]
  %v1291 = vld [vmem:[%s11 + $0xb0] sm:$0xff]
  %v1292 = vld [vmem:[%s11 + $0xb8] sm:$0xff]
  %v1293 = vld [vmem:[%s11 + $0xc0] sm:$0xff]
  %v1294 = vld [vmem:[%s11 + $0xc8] sm:$0xff]
  %v1295 = vld [vmem:[%s11 + $0xd0] sm:$0xff]
  %v1296 = vld [vmem:[%s11 + $0xd8] sm:$0xff]
  %v1297 = vld [vmem:[%s11 + $0xe0] sm:$0xff]
  %v1298 = vld [vmem:[%s11 + $0xe8] sm:$0xff]
  %v1299 = vld [vmem:[%s11 + $0xf0] sm:$0xff]
  %v1300 = vld [vmem:[%s11 + $0xf8] sm:$0xff]
  %1301 = vmatprep.subr.mxu0 0.0
  %1302 = vmatpush1.msra.mxu0 %v1284
  %1303 = vmatprep.subr.mxu0 0.0
  %1304 = vmatpush1.msra.mxu0 %v1283
  %1305 = vmatprep.subr.mxu0 0.0
  %1306 = vmatpush1.msra.mxu0 %v1282
  %1307 = vmatprep.subr.mxu0 0.0
  %1308 = vmatpush1.msra.mxu0 %v1281
  %1309 = vmatprep.subr.mxu0 0.0
  %1310 = vmatpush1.msra.mxu0 %v1280
  %1311 = vmatprep.subr.mxu0 0.0
  %1312 = vmatpush1.msra.mxu0 %v1279
  %1313 = vmatprep.subr.mxu0 0.0
  %1314 = vmatpush1.msra.mxu0 %v1278
  %1315 = vmatprep.subr.mxu0 0.0
  %1316 = vmatpush1.msra.mxu0 %v1277
  %1317 = vmatprep.subr.mxu0 0.0
  %1318 = vmatpush1.msra.mxu0 %v1276
  %1319 = vmatprep.subr.mxu0 0.0
  %1320 = vmatpush1.msra.mxu0 %v1275
  %1321 = vmatprep.subr.mxu0 0.0
  %1322 = vmatpush1.msra.mxu0 %v1274
  %1323 = vmatprep.subr.mxu0 0.0
  %1324 = vmatpush1.msra.mxu0 %v1273
  %1325 = vmatprep.subr.mxu0 0.0
  %1326 = vmatpush1.msra.mxu0 %v1272
  %1327 = vmatprep.subr.mxu0 0.0
  %1328 = vmatpush1.msra.mxu0 %v1271
  %1329 = vmatprep.subr.mxu0 0.0
  %1330 = vmatpush1.msra.mxu0 %v1270
  %1331 = vmatprep.subr.mxu0 0.0
  %1332 = vmatpush1.msra.mxu0 %v1269
  %1333 = vmatprep.subr.mxu0 0.0
  %1334 = vmatpush2.msra.mxu0 %v1300
  %1335 = vmatprep.subr.mxu0 0.0
  %1336 = vmatpush2.msra.mxu0 %v1299
  %1337 = vmatprep.subr.mxu0 0.0
  %1338 = vmatpush2.msra.mxu0 %v1298
  %1339 = vmatprep.subr.mxu0 0.0
  %1340 = vmatpush2.msra.mxu0 %v1297
  %1341 = vmatprep.subr.mxu0 0.0
  %1342 = vmatpush2.msra.mxu0 %v1296
  %1343 = vmatprep.subr.mxu0 0.0
  %1344 = vmatpush2.msra.mxu0 %v1295
  %1345 = vmatprep.subr.mxu0 0.0
  %1346 = vmatpush2.msra.mxu0 %v1294
  %1347 = vmatprep.subr.mxu0 0.0
  %1348 = vmatpush2.msra.mxu0 %v1293
  %1349 = vmatprep.subr.mxu0 0.0
  %1350 = vmatpush2.msra.mxu0 %v1292
  %1351 = vmatprep.subr.mxu0 0.0
  %1352 = vmatpush2.msra.mxu0 %v1291
  %1353 = vmatprep.subr.mxu0 0.0
  %1354 = vmatpush2.msra.mxu0 %v1290
  %1355 = vmatprep.subr.mxu0 0.0
  %1356 = vmatpush2.msra.mxu0 %v1289
  %1357 = vmatprep.subr.mxu0 0.0
  %1358 = vmatpush2.msra.mxu0 %v1288
  %1359 = vmatprep.subr.mxu0 0.0
  %1360 = vmatpush2.msra.mxu0 %v1287
  %1361 = vmatprep.subr.mxu0 0.0
  %1362 = vmatpush2.msra.mxu0 %v1286
  %1363 = vmatprep.subr.mxu0 0.0
  %1364 = vmatpush2.msra.mxu0 %v1285
  %1365 = vmatprep.mubr.f32.mxu0 %v1268
  %1366 = vmatmul.mubr.f32.gmra.mxu0 %v1267
  %v1367 = vpop.f32.mrf.mxu0
  %v1368 = vadd.f32 0.0, %v1367
  %v1369 = vpop.f32.mrf.mxu0
  %1370 = vdwg.mxu0
  %v1371 = vmul.f32 %v1368, 0.001953125
  %v1372 = vmul.f32 %v1371, %v1371
  %v1374 = vrot.slane %v1372, 7
  %v1376 = vsub.f32 %v1371, %v1374
  %v1377 = vmax.f32 %v1376, 0.0
  %v1378 = vadd.f32 %v1377, 1e-05
  %v1379 = vrsqrt.pop %v1378
  %v1381 = vrot.slane %v1379, 1
  %v1384 = vrot.slane %v1371, 7
  %v1386 = vsel %vm435, %v1381, %v1384
  %v1387 = vld [vmem:[%s12] sm:$0xff]
  %v1388 = vld [vmem:[%s12 + $0x8] sm:$0xff]
  %v1390 = vsel %vm558, %v1386, 0
  %1392 = vmatprep.subr.mxu0 0.0
  %1393 = vmatpush1.msra.mxu0 0.0
  %1394 = vmatprep.subr.mxu0 0.0
  %1395 = vmatpush1.msra.mxu0 0.0
  %1396 = vmatprep.subr.mxu0 0.0
  %1397 = vmatpush1.msra.mxu0 0.0
  %1398 = vmatprep.subr.mxu0 0.0
  %1399 = vmatpush1.msra.mxu0 0.0
  %1400 = vmatprep.subr.mxu0 0.0
  %1401 = vmatpush1.msra.mxu0 0.0
  %1402 = vmatprep.subr.mxu0 0.0
  %1403 = vmatpush1.msra.mxu0 0.0
  %1404 = vmatprep.subr.mxu0 0.0
  %1405 = vmatpush1.msra.mxu0 0.0
  %1406 = vmatprep.subr.mxu0 0.0
  %1407 = vmatpush1.msra.mxu0 0.0
  %1408 = vmatprep.subr.mxu0 0.0
  %1409 = vmatpush1.msra.mxu0 0.0
  %1410 = vmatprep.subr.mxu0 0.0
  %1411 = vmatpush1.msra.mxu0 0.0
  %1412 = vmatprep.subr.mxu0 0.0
  %1413 = vmatpush1.msra.mxu0 0.0
  %1414 = vmatprep.subr.mxu0 0.0
  %1415 = vmatpush1.msra.mxu0 0.0
  %1416 = vmatprep.subr.mxu0 0.0
  %1417 = vmatpush1.msra.mxu0 0.0
  %1418 = vmatprep.subr.mxu0 0.0
  %1419 = vmatpush1.msra.mxu0 0.0
  %1420 = vmatprep.subr.mxu0 0.0
  %1421 = vmatpush1.msra.mxu0 0.0
  %1422 = vmatprep.subr.mxu0 %v1388
  %1423 = vmatpush1.msra.mxu0 %v1387
  %1424 = vmatprep.subr.mxu0 0.0
  %1425 = vmatpush2.msra.mxu0 0.0
  %1426 = vmatprep.subr.mxu0 0.0
  %1427 = vmatpush2.msra.mxu0 0.0
  %1428 = vmatprep.subr.mxu0 0.0
  %1429 = vmatpush2.msra.mxu0 0.0
  %1430 = vmatprep.subr.mxu0 0.0
  %1431 = vmatpush2.msra.mxu0 0.0
  %1432 = vmatprep.subr.mxu0 0.0
  %1433 = vmatpush2.msra.mxu0 0.0
  %1434 = vmatprep.subr.mxu0 0.0
  %1435 = vmatpush2.msra.mxu0 0.0
  %1436 = vmatprep.subr.mxu0 0.0
  %1437 = vmatpush2.msra.mxu0 0.0
  %1438 = vmatprep.subr.mxu0 0.0
  %1439 = vmatpush2.msra.mxu0 0.0
  %1440 = vmatprep.subr.mxu0 0.0
  %1441 = vmatpush2.msra.mxu0 0.0
  %1442 = vmatprep.subr.mxu0 0.0
  %1443 = vmatpush2.msra.mxu0 0.0
  %1444 = vmatprep.subr.mxu0 0.0
  %1445 = vmatpush2.msra.mxu0 0.0
  %1446 = vmatprep.subr.mxu0 0.0
  %1447 = vmatpush2.msra.mxu0 0.0
  %1448 = vmatprep.subr.mxu0 0.0
  %1449 = vmatpush2.msra.mxu0 0.0
  %1450 = vmatprep.subr.mxu0 0.0
  %1451 = vmatpush2.msra.mxu0 0.0
  %1452 = vmatprep.subr.mxu0 0.0
  %1453 = vmatpush2.msra.mxu0 0.0
  %1454 = vmatprep.subr.mxu0 0.0
  %1455 = vmatpush2.msra.mxu0 0.0
  %1456 = vmatprep.mubr.f32.mxu0 0.0
  %1457 = vmatmul.mubr.f32.gmra.mxu0 %v1390
  %v1458 = vpop.f32.mrf.mxu0
  %v1459 = vadd.f32 0.0, %v1458
  %v1460 = vpop.f32.mrf.mxu0
  %v1461 = vadd.f32 0.0, %v1460
  %1462 = vdwg.mxu0
  %v1463 = vld [vmem:[%s9] sm:$0x3]
  %v1465 = vlaneseq
  %v1466 = vshrl.u32 %v1465, 7
  %v1467 = vsub.s32 0, %v1466
  %v1468 = vrot.slane %v1463, %v1467
  %v1469 = vlaneseq
  %v1470 = vshrl.u32 %v1469, 7
  %v1471 = vsub.s32 1, %v1470
  %v1472 = vrot.slane %v1463, %v1471
  %v1475 = vmul.f32 %v1459, %v1468
  %v1476 = vmul.f32 %v1461, %v1472
  %v1477 = vld [vmem:[%s10] sm:$0x3]
  %v1480 = vrot.slane %v1475, 7
  %v1481 = vrot.slane %v1476, 7
  %v1484 = vmul.f32 %v1459, %v1480
  %v1485 = vmul.f32 %v1461, %v1481
  %v1488 = vcombine.low %v1484, %v1485
  %v1490 = vunpack.c.l.s4 1966171168
  %v1491 = vunpack.c.0.s8 %v1490
  %v1492 = vlaneseq
  %v1493 = vshrl.u32 %v1492, 7
  %v1494 = vsub.s32 %v1491, %v1493
  %v1495 = vrot.slane %v1488, %v1494
  %v1496 = vcombine.high %v1495, %v1495
  %v1498 = vunpack.c.l.s4 1966171168
  %v1499 = vunpack.c.0.s8 %v1498
  %v1500 = vlaneseq
  %v1501 = vshrl.u32 %v1500, 7
  %v1502 = vsub.s32 %v1499, %v1501
  %v1503 = vrot.slane %v1496, %v1502
  %v1505 = vsub.f32 %v1477, %v1503
  %v1506 = vlaneseq
  %v1507 = vshrl.u32 %v1506, 7
  %v1508 = vsub.s32 0, %v1507
  %v1509 = vrot.slane %v1475, %v1508
  %v1510 = vlaneseq
  %v1511 = vshrl.u32 %v1510, 7
  %v1512 = vsub.s32 0, %v1511
  %v1513 = vrot.slane %v1476, %v1512
  %v1514 = vmul.f32 %v1231, %v1509
  %v1515 = vmul.f32 %v1232, %v1513
  %v1516 = vmul.f32 %v1233, %v1509
  %v1517 = vmul.f32 %v1234, %v1513
  %v1519 = vlaneseq
  %v1520 = vshrl.u32 %v1519, 7
  %v1521 = vsub.s32 0, %v1520
  %v1522 = vrot.slane %v1505, %v1521
  %v1523 = vlaneseq
  %v1524 = vshrl.u32 %v1523, 7
  %v1525 = vsub.s32 1, %v1524
  %v1526 = vrot.slane %v1505, %v1525
  %v1529 = vadd.f32 %v1514, %v1522
  %v1530 = vadd.f32 %v1515, %v1526
  %v1531 = vadd.f32 %v1516, %v1522
  %v1532 = vadd.f32 %v1517, %v1526
  %1533 = vst [vmem:[%s13] sm:$0xff] %v1529
  %1534 = vst [vmem:[%s13 + $0x8] sm:$0xff] %v1530
  %1535 = vst [vmem:[%s13 + $0x10] sm:$0xff] %v1531
  %1536 = vst [vmem:[%s13 + $0x18] sm:$0xff] %v1532
  // Predicated region
  $region54: #{stacked_conv.1} parent=0 // pred_check
    _
  $region55: #{stacked_conv.1} parent=0 // pred_check_branch
    %1538 = sbr.rel (0) target = $region57
  $region56: #{stacked_conv.1} parent=0 // pred_region
    _
  $region57: #{stacked_conv.1} parent=0 // pred_fallthru
    _
  // Predicated region
  $region58: #{stacked_conv.1} parent=0 // pred_check
    _
  $region59: #{stacked_conv.1} parent=0 // pred_check_branch
    %1540 = sbr.rel (0) target = $region61
  $region60: #{stacked_conv.1} parent=0 // pred_region
    _
  $region61: #{stacked_conv.1} parent=0 // pred_fallthru
    _

</llo_original>
